<compile_context>
chip_gen: v5e
topology: v5e:2x2
jax: 0.10.0
libtpu: 0.0.40
codegen_flags: <defaults>
</compile_context>

<pallas_src>
import math

import jax
import jax.numpy as jnp
from jax.experimental import pallas as pl
from jax.experimental.pallas import tpu as pltpu


def pam_flash_kernel(xq_ref, xk_ref, bias_ref, mqk_ref, wv_ref, bv_ref, gamma_ref,
                     out_ref, qm_sc, m_sc, l_sc, acc_sc):
    ki = pl.program_id(2)

    @pl.when(ki == 0)
    def _init():
        # qm = Xq^T @ M via a transposed-LHS contraction (MXU; no XLU transpose).
        qm = jax.lax.dot_general(
            xq_ref[0], mqk_ref[...],
            dimension_numbers=(((0,), (0,)), ((), ())),
            preferred_element_type=jnp.float32)                      # (TQ, C) f32
        qm_sc[...] = qm.astype(jnp.bfloat16)
        m_sc[...] = jnp.full_like(m_sc, -jnp.inf)
        l_sc[...] = jnp.zeros_like(l_sc)
        acc_sc[...] = jnp.zeros_like(acc_sc)

    xk = xk_ref[0]                                                   # (C, TK) bf16

    # energy tile (TQ, TK): folded Wq^T Wk contraction + precomputed column bias.
    e = jnp.dot(qm_sc[...], xk, preferred_element_type=jnp.float32)
    e = e + bias_ref[0]                                              # (1, TK) broadcast

    # online softmax (f32)
    m_prev = m_sc[...]
    m_new = jnp.maximum(m_prev, jnp.max(e, axis=-1, keepdims=True))
    alpha = jnp.exp(m_prev - m_new)
    p = jnp.exp(e - m_new)                                           # (TQ, TK) f32
    l_sc[...] = alpha * l_sc[...] + jnp.sum(p, axis=-1, keepdims=True)
    # un-normalized attention-weighted sum of raw x columns: acc += p @ xk^T
    acc_sc[...] = alpha * acc_sc[...] + jax.lax.dot_general(
        p.astype(jnp.bfloat16), xk,
        dimension_numbers=(((1,), (1,)), ((), ())),
        preferred_element_type=jnp.float32)                          # (TQ, C)
    m_sc[...] = m_new

    @pl.when(ki == pl.num_programs(2) - 1)
    def _finalize():
        inv_l = pl.reciprocal(l_sc[...], approx=True)                # (TQ, 1), EUP slot
        acc_n = (acc_sc[...] * inv_l).astype(jnp.bfloat16)           # (TQ, C_in)
        # Deferred value projection: (C_out, TQ) = Wv @ acc_n^T (lane-dense output);
        # bv added once after normalization (softmax weights sum to 1).
        out_cq = jax.lax.dot_general(
            wv_ref[...], acc_n,
            dimension_numbers=(((1,), (1,)), ((), ())),
            preferred_element_type=jnp.float32)
        out_ref[0] = gamma_ref[0, 0] * (out_cq + bv_ref[...]) + xq_ref[0]


def _round_up(x, m):
    return (x + m - 1) // m * m


def _default_tiles(n):
    """Prefer large tiles for kv-stream reuse; cap by the (128-padded) spatial size."""
    n128 = _round_up(n, 128)
    tq = min(1024, n128)   # reuse factor: kv HBM traffic scales as N / TQ
    tk = min(512, n128)    # keep >= 256 where possible so MXU contraction stays deep
    return tq, tk


def pam_forward(x_nchw, wq, bq, wk, bk, wv, bv, gamma, *, tq=None, tk=None):
    """Position-attention forward.  x_nchw: (B, C, H, W); wq/wk: (C//8, C, 1, 1);
    wv: (C, C, 1, 1).

    bk only shifts each energy row by a per-row constant and therefore cancels under
    softmax; it is accepted for signature parity but unused.
    """
    del bk
    B, C, H, W = x_nchw.shape
    N = H * W
    Cq = wq.shape[0]

    dtq, dtk = _default_tiles(N)
    tq = tq or dtq
    tk = tk or dtk
    # NOTE(v7x): for dual-TC utilization keep B * (N_pad // tq) >= 2 when choosing tq.
    lcm = tq * tk // math.gcd(tq, tk)
    n_pad = _round_up(N, lcm)
    pad = n_pad - N

    # NCHW -> (B, C, N): pure reshape, no host transpose.
    x_bcn = x_nchw.reshape(B, C, N).astype(jnp.float32)

    wq2 = wq.reshape(Cq, C).astype(jnp.float32)
    wk2 = wk.reshape(Cq, C).astype(jnp.float32)
    m_mat = wq2.T @ wk2                                    # (C, C) folded Wq^T Wk, f32
    wkbq = wk2.T @ bq.astype(jnp.float32)                  # (C,)
    # Per-column energy bias c_j = (Wk^T bq) . x_j (the bk terms cancel under softmax);
    # padded columns get -1e30 so their softmax weight underflows to exactly 0.
    bias_bn = jnp.einsum("c,bcn->bn", wkbq, x_bcn)
    bias_bn = jnp.pad(bias_bn, ((0, 0), (0, pad)), constant_values=-1e30)
    bias_b1n = bias_bn[:, None, :]                         # (B, 1, N_pad) f32

    x_pad = jnp.pad(x_bcn, ((0, 0), (0, 0), (0, pad)))     # query / residual stream, f32
    x_kv = x_pad.astype(jnp.bfloat16)                      # kv stream, bf16 (half HBM traffic)

    wv2 = wv.reshape(C, C).astype(jnp.bfloat16)            # (C_out, C_in)
    bv_r = bv.reshape(C, 1).astype(jnp.float32)
    gamma_r = gamma.reshape(1, 1).astype(jnp.float32)

    grid = (B, n_pad // tq, n_pad // tk)

    out_bcn = pl.pallas_call(
        pam_flash_kernel,
        out_shape=jax.ShapeDtypeStruct((B, C, n_pad), jnp.float32),
        grid_spec=pltpu.PrefetchScalarGridSpec(
            num_scalar_prefetch=0,
            grid=grid,
            in_specs=[
                pl.BlockSpec((1, C, tq), lambda b, qi, ki: (b, 0, qi)),   # x query/residual (f32)
                pl.BlockSpec((1, C, tk), lambda b, qi, ki: (b, 0, ki)),   # x key/value stream (bf16)
                pl.BlockSpec((1, 1, tk), lambda b, qi, ki: (b, 0, ki)),   # column bias c_j (f32)
                pl.BlockSpec((C, C), lambda b, qi, ki: (0, 0)),           # M = Wq^T Wk (f32)
                pl.BlockSpec((C, C), lambda b, qi, ki: (0, 0)),           # Wv (bf16)
                pl.BlockSpec((C, 1), lambda b, qi, ki: (0, 0)),           # bv (f32)
                pl.BlockSpec((1, 1), lambda b, qi, ki: (0, 0),
                             memory_space=pltpu.SMEM),                    # gamma
            ],
            out_specs=pl.BlockSpec((1, C, tq), lambda b, qi, ki: (b, 0, qi)),
            scratch_shapes=[
                pltpu.VMEM((tq, C), jnp.bfloat16),   # cached q @ M
                pltpu.VMEM((tq, 1), jnp.float32),    # running max m
                pltpu.VMEM((tq, 1), jnp.float32),    # running denom l
                pltpu.VMEM((tq, C), jnp.float32),    # running (un-normalized) x accumulator
            ],
        ),
        compiler_params=pltpu.CompilerParams(
            dimension_semantics=("parallel", "parallel", "arbitrary"),
            # Above v5e's 16 MiB / v6e-v7x's 32 MiB default scoped limits, below v7x's
            # 64 MiB physical VMEM.  (The constant (C, C) weight blocks could also use
            # pipeline_mode=pl.Buffered(1) to skip double-buffering if VMEM gets tight.)
            vmem_limit_bytes=48 * 1024 * 1024,
        ),
    )(x_pad, x_kv, bias_b1n, m_mat, wv2, bv_r, gamma_r)

    return out_bcn[:, :, :N].reshape(B, C, H, W)


def pam_reference(x_nchw, wq, bq, wk, bk, wv, bv, gamma):
    """Pure-jnp f32 reference mirroring the PyTorch forward exactly."""
    B, C, H, W = x_nchw.shape
    N = H * W
    Cq = wq.shape[0]
    x_flat = x_nchw.reshape(B, C, N)
    q = jnp.einsum("oc,bcn->bon", wq.reshape(Cq, C), x_flat) + bq[None, :, None]
    k = jnp.einsum("oc,bcn->bon", wk.reshape(Cq, C), x_flat) + bk[None, :, None]
    v = jnp.einsum("oc,bcn->bon", wv.reshape(C, C), x_flat) + bv[None, :, None]
    energy = jnp.einsum("bci,bcj->bij", q, k)              # (B, N, N)
    attn = jax.nn.softmax(energy, axis=-1)
    out = jnp.einsum("bcj,bij->bci", v, attn)              # (B, C, N)
    out = out.reshape(B, C, H, W)
    return gamma[0] * out + x_nchw


if __name__ == "__main__":
    B, C, H, W = 2, 64, 16, 16
    Cq = C // 8

    key = jax.random.PRNGKey(0)
    kx, kwq, kbq, kwk, kbk, kwv, kbv = jax.random.split(key, 7)

    x = jax.random.normal(kx, (B, C, H, W), dtype=jnp.float32)
    wq = jax.random.normal(kwq, (Cq, C, 1, 1), dtype=jnp.float32) * 0.1
    bq = jax.random.normal(kbq, (Cq,), dtype=jnp.float32) * 0.1
    wk = jax.random.normal(kwk, (Cq, C, 1, 1), dtype=jnp.float32) * 0.1
    bk = jax.random.normal(kbk, (Cq,), dtype=jnp.float32) * 0.1
    wv = jax.random.normal(kwv, (C, C, 1, 1), dtype=jnp.float32) * 0.1
    bv = jax.random.normal(kbv, (C,), dtype=jnp.float32) * 0.1
    # NOTE: the PyTorch module initializes gamma to 0 (output == x); use a nonzero
    # deterministic value so the attention path is actually exercised.
    gamma = jnp.array([0.5], dtype=jnp.float32)

    # 1) Multi-kv-step path (grid (2, 2, 2)): exercises init / accumulate / finalize
    #    of the online softmax across two kv tiles.
    out = pam_forward(x, wq, bq, wk, bk, wv, bv, gamma, tq=128, tk=128)
    out = jax.block_until_ready(out)
    ref = pam_reference(x, wq, bq, wk, bk, wv, bv, gamma)
    assert out.shape == (B, C, H, W)
    # bf16 MXU operands (f32 accumulation) vs. the pure-f32 reference -> looser tolerance.
    assert jnp.allclose(out, ref, atol=5e-2, rtol=5e-2), "mismatch vs reference (tq=tk=128)"

    # 2) Default tiles with a non-128-multiple spatial size (13x13 -> N=169, padded to
    #    256): exercises the spatial pad + (-1e30) column-mask path.
    H2 = W2 = 13
    x2 = jax.random.normal(kx, (B, C, H2, W2), dtype=jnp.float32)
    out2 = jax.block_until_ready(pam_forward(x2, wq, bq, wk, bk, wv, bv, gamma))
    ref2 = pam_reference(x2, wq, bq, wk, bk, wv, bv, gamma)
    assert out2.shape == (B, C, H2, W2)
    assert jnp.allclose(out2, ref2, atol=5e-2, rtol=5e-2), "mismatch vs reference (padded)"

    print("KERNEL_OK")
</pallas_src>

<mosaic_0001>
module attributes {stable_mosaic.version = 11 : i64} {
  func.func @pam_flash_kernel(%arg0: i32, %arg1: i32, %arg2: i32, %arg3: memref<1x64x128xf32, #tpu.memory_space<vmem>>, %arg4: memref<1x64x128xbf16, #tpu.memory_space<vmem>>, %arg5: memref<1x1x128xf32, #tpu.memory_space<vmem>>, %arg6: memref<64x64xf32, #tpu.memory_space<vmem>>, %arg7: memref<64x64xbf16, #tpu.memory_space<vmem>>, %arg8: memref<64x1xf32, #tpu.memory_space<vmem>>, %arg9: memref<1x1xf32, #tpu.memory_space<smem>>, %arg10: memref<1x64x128xf32, #tpu.memory_space<vmem>>, %arg11: memref<128x64xbf16, #tpu.memory_space<vmem>>, %arg12: memref<128x1xf32, #tpu.memory_space<vmem>>, %arg13: memref<128x1xf32, #tpu.memory_space<vmem>>, %arg14: memref<128x64xf32, #tpu.memory_space<vmem>>) attributes {dimension_semantics = [#tpu.dimension_semantics<parallel>, #tpu.dimension_semantics<parallel>, #tpu.dimension_semantics<arbitrary>], iteration_bounds = array<i64: 2, 2, 2>, scalar_prefetch = 0 : i64, scratch_operands = 4 : i64, tpu.core_type = #tpu.core_type<tc>, window_params = [{transform_indices = @transform_0, window_bounds = array<i64: 1, 64, 128>}, {transform_indices = @transform_1, window_bounds = array<i64: 1, 64, 128>}, {transform_indices = @transform_2, window_bounds = array<i64: 1, 1, 128>}, {pipeline_mode = #tpu.pipeline_mode<synchronous>, transform_indices = @transform_3, window_bounds = array<i64: 64, 64>}, {pipeline_mode = #tpu.pipeline_mode<synchronous>, transform_indices = @transform_4, window_bounds = array<i64: 64, 64>}, {pipeline_mode = #tpu.pipeline_mode<synchronous>, transform_indices = @transform_5, window_bounds = array<i64: 64, 1>}, {transform_indices = @transform_6, window_bounds = array<i64: 1, 1>}, {transform_indices = @transform_7, window_bounds = array<i64: 1, 64, 128>}]} {
    %c0_i32 = arith.constant 0 : i32
    %0 = arith.cmpi eq, %arg2, %c0_i32 : i32
    %1 = arith.extui %0 : i1 to i32
    %c0_i32_0 = arith.constant 0 : i32
    %2 = arith.cmpi ne, %1, %c0_i32_0 : i32
    scf.if %2 {
      %c0_24 = arith.constant 0 : index
      %c0_25 = arith.constant 0 : index
      %c0_26 = arith.constant 0 : index
      %37 = vector.load %arg3[%c0_24, %c0_25, %c0_26] : memref<1x64x128xf32, #tpu.memory_space<vmem>>, vector<1x64x128xf32>
      %38 = vector.shape_cast %37 : vector<1x64x128xf32> to vector<64x128xf32>
      %c0_27 = arith.constant 0 : index
      %c0_28 = arith.constant 0 : index
      %39 = vector.load %arg6[%c0_27, %c0_28] : memref<64x64xf32, #tpu.memory_space<vmem>>, vector<64x64xf32>
      %cst_29 = arith.constant dense<0.000000e+00> : vector<128x64xf32>
      %40 = tpu.matmul %38, %39, %cst_29 {dimension_numbers = #tpu.dot_dimension_numbers<[0], [0], [1], [1], [0, 1, 1, 1], [], []>} : vector<64x128xf32>, vector<64x64xf32>, vector<128x64xf32> -> vector<128x64xf32>
      %41 = arith.truncf %40 : vector<128x64xf32> to vector<128x64xbf16>
      %c0_30 = arith.constant 0 : index
      %c0_31 = arith.constant 0 : index
      %42 = vector.load %arg11[%c0_30, %c0_31] : memref<128x64xbf16, #tpu.memory_space<vmem>>, vector<128x64xbf16>
      tpu.vector_store %arg11[%c0_30, %c0_31], %41 {strides = array<i32>} : memref<128x64xbf16, #tpu.memory_space<vmem>>, vector<128x64xbf16>,
      %cst_32 = arith.constant 0xFF800000 : f32
      %43 = vector.broadcast %cst_32 : f32 to vector<128x1xf32>
      %c0_33 = arith.constant 0 : index
      %c0_34 = arith.constant 0 : index
      %44 = vector.load %arg12[%c0_33, %c0_34] : memref<128x1xf32, #tpu.memory_space<vmem>>, vector<128x1xf32>
      tpu.vector_store %arg12[%c0_33, %c0_34], %43 {strides = array<i32>} : memref<128x1xf32, #tpu.memory_space<vmem>>, vector<128x1xf32>,
      %cst_35 = arith.constant 0.000000e+00 : f32
      %45 = vector.broadcast %cst_35 : f32 to vector<128x1xf32>
      %c0_36 = arith.constant 0 : index
      %c0_37 = arith.constant 0 : index
      %46 = vector.load %arg13[%c0_36, %c0_37] : memref<128x1xf32, #tpu.memory_space<vmem>>, vector<128x1xf32>
      tpu.vector_store %arg13[%c0_36, %c0_37], %45 {strides = array<i32>} : memref<128x1xf32, #tpu.memory_space<vmem>>, vector<128x1xf32>,
      %cst_38 = arith.constant 0.000000e+00 : f32
      %47 = vector.broadcast %cst_38 : f32 to vector<128x64xf32>
      %c0_39 = arith.constant 0 : index
      %c0_40 = arith.constant 0 : index
      %48 = vector.load %arg14[%c0_39, %c0_40] : memref<128x64xf32, #tpu.memory_space<vmem>>, vector<128x64xf32>
      tpu.vector_store %arg14[%c0_39, %c0_40], %47 {strides = array<i32>} : memref<128x64xf32, #tpu.memory_space<vmem>>, vector<128x64xf32>,
    } else {
    }
    %c0 = arith.constant 0 : index
    %c0_1 = arith.constant 0 : index
    %c0_2 = arith.constant 0 : index
    %3 = vector.load %arg4[%c0, %c0_1, %c0_2] : memref<1x64x128xbf16, #tpu.memory_space<vmem>>, vector<1x64x128xbf16>
    %4 = vector.shape_cast %3 : vector<1x64x128xbf16> to vector<64x128xbf16>
    %c0_3 = arith.constant 0 : index
    %c0_4 = arith.constant 0 : index
    %5 = vector.load %arg11[%c0_3, %c0_4] : memref<128x64xbf16, #tpu.memory_space<vmem>>, vector<128x64xbf16>
    %cst = arith.constant dense<0.000000e+00> : vector<128x128xf32>
    %6 = tpu.matmul %5, %4, %cst {dimension_numbers = #tpu.dot_dimension_numbers<[1], [0], [0], [1], [0, 0, 1, 1], [], []>} : vector<128x64xbf16>, vector<64x128xbf16>, vector<128x128xf32> -> vector<128x128xf32>
    %c0_5 = arith.constant 0 : index
    %c0_6 = arith.constant 0 : index
    %c0_7 = arith.constant 0 : index
    %7 = vector.load %arg5[%c0_5, %c0_6, %c0_7] : memref<1x1x128xf32, #tpu.memory_space<vmem>>, vector<1x1x128xf32>
    %8 = vector.shape_cast %7 : vector<1x1x128xf32> to vector<1x128xf32>
    %9 = vector.broadcast %8 : vector<1x128xf32> to vector<128x128xf32>
    %10 = arith.addf %6, %9 : vector<128x128xf32>
    %c0_8 = arith.constant 0 : index
    %c0_9 = arith.constant 0 : index
    %11 = vector.load %arg12[%c0_8, %c0_9] : memref<128x1xf32, #tpu.memory_space<vmem>>, vector<128x1xf32>
    %cst_10 = arith.constant dense<0xFF800000> : vector<128xf32>
    %12 = vector.multi_reduction <maximumf>, %10, %cst_10 [1] : vector<128x128xf32> to vector<128xf32>
    %13 = vector.shape_cast %12 : vector<128xf32> to vector<128x1xf32>
    %14 = arith.maximumf %11, %13 : vector<128x1xf32>
    %15 = arith.subf %11, %14 : vector<128x1xf32>
    %16 = math.exp %15 : vector<128x1xf32>
    %17 = vector.broadcast %14 : vector<128x1xf32> to vector<128x128xf32>
    %18 = arith.subf %10, %17 : vector<128x128xf32>
    %19 = math.exp %18 : vector<128x128xf32>
    %c0_11 = arith.constant 0 : index
    %c0_12 = arith.constant 0 : index
    %20 = vector.load %arg13[%c0_11, %c0_12] : memref<128x1xf32, #tpu.memory_space<vmem>>, vector<128x1xf32>
    %21 = arith.mulf %16, %20 : vector<128x1xf32>
    %cst_13 = arith.constant dense<0.000000e+00> : vector<128xf32>
    %22 = vector.multi_reduction <add>, %19, %cst_13 [1] : vector<128x128xf32> to vector<128xf32>
    %23 = vector.shape_cast %22 : vector<128xf32> to vector<128x1xf32>
    %24 = arith.addf %21, %23 : vector<128x1xf32>
    %c0_14 = arith.constant 0 : index
    %c0_15 = arith.constant 0 : index
    %25 = vector.load %arg13[%c0_14, %c0_15] : memref<128x1xf32, #tpu.memory_space<vmem>>, vector<128x1xf32>
    tpu.vector_store %arg13[%c0_14, %c0_15], %24 {strides = array<i32>} : memref<128x1xf32, #tpu.memory_space<vmem>>, vector<128x1xf32>,
    %c0_16 = arith.constant 0 : index
    %c0_17 = arith.constant 0 : index
    %26 = vector.load %arg14[%c0_16, %c0_17] : memref<128x64xf32, #tpu.memory_space<vmem>>, vector<128x64xf32>
    %27 = vector.broadcast %16 : vector<128x1xf32> to vector<128x64xf32>
    %28 = arith.mulf %27, %26 : vector<128x64xf32>
    %29 = arith.truncf %19 : vector<128x128xf32> to vector<128x128xbf16>
    %cst_18 = arith.constant dense<0.000000e+00> : vector<128x64xf32>
    %30 = tpu.matmul %29, %4, %cst_18 {dimension_numbers = #tpu.dot_dimension_numbers<[1], [1], [0], [0], [0, 0, 1, 0], [], []>} : vector<128x128xbf16>, vector<64x128xbf16>, vector<128x64xf32> -> vector<128x64xf32>
    %31 = arith.addf %28, %30 : vector<128x64xf32>
    %c0_19 = arith.constant 0 : index
    %c0_20 = arith.constant 0 : index
    %32 = vector.load %arg14[%c0_19, %c0_20] : memref<128x64xf32, #tpu.memory_space<vmem>>, vector<128x64xf32>
    tpu.vector_store %arg14[%c0_19, %c0_20], %31 {strides = array<i32>} : memref<128x64xf32, #tpu.memory_space<vmem>>, vector<128x64xf32>,
    %c0_21 = arith.constant 0 : index
    %c0_22 = arith.constant 0 : index
    %33 = vector.load %arg12[%c0_21, %c0_22] : memref<128x1xf32, #tpu.memory_space<vmem>>, vector<128x1xf32>
    tpu.vector_store %arg12[%c0_21, %c0_22], %14 {strides = array<i32>} : memref<128x1xf32, #tpu.memory_space<vmem>>, vector<128x1xf32>,
    %c1_i32 = arith.constant 1 : i32
    %34 = arith.cmpi eq, %arg2, %c1_i32 : i32
    %35 = arith.extui %34 : i1 to i32
    %c0_i32_23 = arith.constant 0 : i32
    %36 = arith.cmpi ne, %35, %c0_i32_23 : i32
    scf.if %36 {
      %c0_24 = arith.constant 0 : index
      %c0_25 = arith.constant 0 : index
      %37 = vector.load %arg13[%c0_24, %c0_25] : memref<128x1xf32, #tpu.memory_space<vmem>>, vector<128x1xf32>
      %38 = tpu.reciprocal %37 {approx = true} : vector<128x1xf32> -> vector<128x1xf32>
      %c0_26 = arith.constant 0 : index
      %c0_27 = arith.constant 0 : index
      %39 = vector.load %arg14[%c0_26, %c0_27] : memref<128x64xf32, #tpu.memory_space<vmem>>, vector<128x64xf32>
      %40 = vector.broadcast %38 : vector<128x1xf32> to vector<128x64xf32>
      %41 = arith.mulf %39, %40 : vector<128x64xf32>
      %42 = arith.truncf %41 : vector<128x64xf32> to vector<128x64xbf16>
      %c0_28 = arith.constant 0 : index
      %c0_29 = arith.constant 0 : index
      %43 = vector.load %arg7[%c0_28, %c0_29] : memref<64x64xbf16, #tpu.memory_space<vmem>>, vector<64x64xbf16>
      %cst_30 = arith.constant dense<0.000000e+00> : vector<64x128xf32>
      %44 = tpu.matmul %43, %42, %cst_30 {dimension_numbers = #tpu.dot_dimension_numbers<[1], [1], [0], [0], [0, 0, 1, 0], [], []>} : vector<64x64xbf16>, vector<128x64xbf16>, vector<64x128xf32> -> vector<64x128xf32>
      %c0_31 = arith.constant 0 : index
      %c0_32 = arith.constant 0 : index
      %45 = memref.load %arg9[%c0_31, %c0_32] : memref<1x1xf32, #tpu.memory_space<smem>>
      %c0_33 = arith.constant 0 : index
      %c0_34 = arith.constant 0 : index
      %46 = vector.load %arg8[%c0_33, %c0_34] : memref<64x1xf32, #tpu.memory_space<vmem>>, vector<64x1xf32>
      %47 = vector.broadcast %46 : vector<64x1xf32> to vector<64x128xf32>
      %48 = arith.addf %44, %47 : vector<64x128xf32>
      %49 = vector.broadcast %45 : f32 to vector<64x128xf32>
      %50 = arith.mulf %49, %48 : vector<64x128xf32>
      %c0_35 = arith.constant 0 : index
      %c0_36 = arith.constant 0 : index
      %c0_37 = arith.constant 0 : index
      %51 = vector.load %arg3[%c0_35, %c0_36, %c0_37] : memref<1x64x128xf32, #tpu.memory_space<vmem>>, vector<1x64x128xf32>
      %52 = vector.shape_cast %51 : vector<1x64x128xf32> to vector<64x128xf32>
      %53 = arith.addf %50, %52 : vector<64x128xf32>
      %c0_38 = arith.constant 0 : index
      %c0_39 = arith.constant 0 : index
      %c0_40 = arith.constant 0 : index
      %54 = vector.load %arg10[%c0_38, %c0_39, %c0_40] : memref<1x64x128xf32, #tpu.memory_space<vmem>>, vector<1x64x128xf32>
      %55 = vector.shape_cast %54 : vector<1x64x128xf32> to vector<64x128xf32>
      %56 = vector.shape_cast %53 : vector<64x128xf32> to vector<1x64x128xf32>
      tpu.vector_store %arg10[%c0_38, %c0_39, %c0_40], %56 {strides = array<i32>} : memref<1x64x128xf32, #tpu.memory_space<vmem>>, vector<1x64x128xf32>,
    } else {
    }
    return
  }
  func.func @transform_0(%arg0: i32, %arg1: i32, %arg2: i32) -> (i32, i32, i32) {
    %c0_i32 = arith.constant 0 : i32
    %c0_i32_0 = arith.constant 0 : i32
    return %arg0, %c0_i32, %arg1 : i32, i32, i32
  }
  func.func @transform_1(%arg0: i32, %arg1: i32, %arg2: i32) -> (i32, i32, i32) {
    %c0_i32 = arith.constant 0 : i32
    %c0_i32_0 = arith.constant 0 : i32
    return %arg0, %c0_i32, %arg2 : i32, i32, i32
  }
  func.func @transform_2(%arg0: i32, %arg1: i32, %arg2: i32) -> (i32, i32, i32) {
    %c0_i32 = arith.constant 0 : i32
    %c0_i32_0 = arith.constant 0 : i32
    return %arg0, %c0_i32, %arg2 : i32, i32, i32
  }
  func.func @transform_3(%arg0: i32, %arg1: i32, %arg2: i32) -> (i32, i32) {
    %c0_i32 = arith.constant 0 : i32
    %c0_i32_0 = arith.constant 0 : i32
    %c0_i32_1 = arith.constant 0 : i32
    return %c0_i32, %c0_i32_0 : i32, i32
  }
  func.func @transform_4(%arg0: i32, %arg1: i32, %arg2: i32) -> (i32, i32) {
    %c0_i32 = arith.constant 0 : i32
    %c0_i32_0 = arith.constant 0 : i32
    %c0_i32_1 = arith.constant 0 : i32
    return %c0_i32, %c0_i32_0 : i32, i32
  }
  func.func @transform_5(%arg0: i32, %arg1: i32, %arg2: i32) -> (i32, i32) {
    %c0_i32 = arith.constant 0 : i32
    %c0_i32_0 = arith.constant 0 : i32
    %c0_i32_1 = arith.constant 0 : i32
    return %c0_i32, %c0_i32_0 : i32, i32
  }
  func.func @transform_6(%arg0: i32, %arg1: i32, %arg2: i32) -> (i32, i32) {
    %c0_i32 = arith.constant 0 : i32
    %c0_i32_0 = arith.constant 0 : i32
    %c0_i32_1 = arith.constant 0 : i32
    return %c0_i32, %c0_i32_0 : i32, i32
  }
  func.func @transform_7(%arg0: i32, %arg1: i32, %arg2: i32) -> (i32, i32, i32) {
    %c0_i32 = arith.constant 0 : i32
    %c0_i32_0 = arith.constant 0 : i32
    return %arg0, %c0_i32, %arg1 : i32, i32, i32
  }
}

</mosaic_0001>

<llo_original>
// kernel: tpu_custom_call.1
$region0: #{tpu_custom_call.1}
  #allocation0 [shape = 'u32[]', space=smem, size = 0x4, offset = 0x4, fixed_abs, tag = 'smem constant byte address 0x4 - core index']
  #allocation1 [shape = 'u32[72,128]{1,0:T(1,128)}', space=vmem, size = 0x9000, scoped, tag = 'internal scratch']
  #allocation2 [shape = 'bf16[128,64]{1,0:T(8,128)(2,1)}', space=vmem, size = 0x8000, scoped, tag = 'scratch operand']
  #allocation3 [shape = 'f32[128,1]{1,0:T(8,128)}', space=vmem, size = 0x10000, scoped, tag = 'scratch operand']
  #allocation4 [shape = 'f32[128,1]{1,0:T(8,128)}', space=vmem, size = 0x10000, scoped, tag = 'scratch operand']
  #allocation5 [shape = 'f32[128,64]{1,0:T(8,128)}', space=vmem, size = 0x10000, scoped, tag = 'scratch operand']
  #allocation6 [shape = 'f32[1,1]{1,0:T(1,128)S(6)}', space=smem, size = 0x200, scoped, tag = 'scoped memory for tpu_custom_call.1']
  %s0 = inlined_call_operand.hbm [shape: f32[2,64,256], index: 0, kind: input, shape index: {}]
  %s1 = inlined_call_operand.hbm [shape: bf16[2,64,256], index: 1, kind: input, shape index: {}]
  %s2 = inlined_call_operand.hbm [shape: f32[2,1,256], index: 2, kind: input, shape index: {}]
  %s3 = inlined_call_operand.vmem [shape: f32[64,64], index: 3, kind: input, shape index: {}]
  %s4 = inlined_call_operand.hbm [shape: bf16[64,64], index: 4, kind: input, shape index: {}]
  %s5 = inlined_call_operand.vmem [shape: f32[64,1], index: 5, kind: input, shape index: {}]
  %s6 = inlined_call_operand.<no memory space> [shape: f32[1,1], index: 6, kind: input, shape index: {}]
  %s7 = inlined_call_operand.hbm [shape: f32[2,64,256], index: 7, kind: output, shape index: {}]
  %s8 = sld [smem:[#allocation0]]
  $region85: #{tpu_custom_call.1} parent=0
    _
  %s10 = ssub.s32 1, %s8
  %s11 = scalar_select 0, %s10, %s8
  %12 = sst [smem:[#allocation6]] %s6
  $region1: #{tpu_custom_call.1} parent=0
    #allocation7 [shape = 'u8[65536]{0}', space=vmem, size = 0x10000, scoped, tag = 'input window, operand 0']
    #allocation8 [shape = 's32[2]{0}', space=sflag, size = 0x8, scoped, tag = 'scoped memory for tpu_custom_call.1']
    #allocation9 [shape = 's32[2]{0}', space=sflag, size = 0x8, scoped, tag = 'scoped memory for tpu_custom_call.1']
    #allocation10 [shape = 'u8[32768]{0}', space=vmem, size = 0x8000, scoped, tag = 'input window, operand 1']
    #allocation11 [shape = 's32[2]{0}', space=sflag, size = 0x8, scoped, tag = 'scoped memory for tpu_custom_call.1']
    #allocation12 [shape = 'u8[1024]{0}', space=vmem, size = 0x400, scoped, tag = 'input window, operand 2']
    #allocation13 [shape = 'u8[16384]{0}', space=vmem, size = 0x4000, scoped, tag = 'input window, operand 4, single buffered']
    #allocation14 [shape = 's32[1]{0}', space=sflag, size = 0x4, scoped, tag = 'scoped memory for tpu_custom_call.1']
    #allocation15 [shape = 'u8[65536]{0}', space=vmem, size = 0x10000, scoped, tag = 'output window, operand 0']
    %13 = vsyncpa [#allocation8], 0
    %s14 = scalar_lea.sflag [#allocation8], 1
    %15 = vsyncpa %s14, 0
    %16 = vsyncpa [#allocation11], 0
    %s17 = scalar_lea.sflag [#allocation11], 1
    %18 = vsyncpa %s17, 0
    %19 = vsyncpa [#allocation14], 0
    %20 = vsyncpa [#allocation9], 0
    %s21 = scalar_lea.sflag [#allocation9], 1
    %22 = vsyncpa %s21, 0
    loop: start=0, step=1, limit=10
    $region2: #{tpu_custom_call.1} parent=1 // loop_pre_header
      _
    $region3: #{tpu_custom_call.1} parent=1 // loop_header
      %s24 = sphi 0, %s28
      %p25 = scmp.ge.s32.totalorder %s24, 10
      %s31 = sphi 0, %s50
      %s32 = sphi 0, %s46
      %s33 = sphi 0, %s42
      %s34 = sphi 0, %s31
      %s35 = sphi 0, %s32
      %s36 = sphi 0, %s33
      %s37 = sphi 0, %s34
      %s38 = sphi 0, %s35
      %s39 = sphi 0, %s36
      %s55 = sphi 0, %s57
      %s58 = sphi 0, %s55
      %s59 = sphi 0, %s58
      %s75 = sphi 0, %s59
      %s83 = sphi 0, %s85
      %s86 = sphi 0, %s83
      %s87 = sphi 0, %s86
      %s103 = sphi 0, %s87
      %s111 = sphi 0, %s113
      %s114 = sphi 0, %s111
      %s115 = sphi 0, %s114
      %s131 = sphi 0, %s115
      %s135 = sphi 0, %s135
      %s137 = sphi 0, %s135
      %s138 = sphi 0, %s137
      %s152 = sphi 0, %s138
      %s156 = sphi 0, %s156
      %s158 = sphi 0, %s156
      %s159 = sphi 0, %s158
      %s173 = sphi 0, %s159
      %s177 = sphi 0, %s177
      %s179 = sphi 0, %s177
      %s180 = sphi 0, %s179
      %s194 = sphi 0, %s180
      %s198 = sphi 0, %s198
      %s200 = sphi 0, %s198
      %s201 = sphi 0, %s200
      %s215 = sphi 0, %s201
      %s223 = sphi 0, %s225
      %s226 = sphi 0, %s223
      %s227 = sphi 0, %s226
      %s243 = sphi 0, %s227
    $region4: #{tpu_custom_call.1} parent=1 // loop_header_branch
      %27 = sbr.rel (%p25) target = $region8
    $region5: #{tpu_custom_call.1} parent=1 // loop_body
      %s29 = ssub.s32 %s24, 1
      %s30 = ssub.s32 %s24, 2
      %s40 = sadd.s32 1, %s33
      %p41 = scmp.ge.s32.totalorder %s40, 2
      %s42 = scalar_select %p41, 0, %s40
      %s43 = sadd.s32 1, %s32
      %s44 = scalar_select %p41, %s43, %s32
      %p45 = scmp.ge.s32.totalorder %s44, 2
      %s46 = scalar_select %p45, 0, %s44
      %s47 = sadd.s32 1, %s31
      %s48 = scalar_select %p45, %s47, %s31
      %p49 = scmp.ge.s32.totalorder %s48, 2
      %s50 = scalar_select %p49, 0, %s48
      %s51 = ssub.s32 %s31, %s50
      %s52 = ssub.s32 %s32, %s46
      %s53 = sor.u32 %s51, %s52
      %p54 = scmp.eq.s32.totalorder %s53, 0
      %s56 = sadd.s32 %s55, 1
      %s57 = scalar_select %p54, %s55, %s56
      %p60 = pneg %p54
      %p61 = scmp.eq.s32.totalorder %s24, 7
      %p62 = por %p60, %p61
      %p63 = scmp.ne.s32.totalorder %s55, %s58
      %p64 = scmp.eq.s32.totalorder %s24, 0
      %p65 = por %p63, %p64
      %p66 = scmp.ne.s32.totalorder %s55, %s58
      %p67 = scmp.eq.s32.totalorder %s29, 7
      %p68 = por %p66, %p67
      %p69 = scmp.ne.s32.totalorder %s58, %s59
      %p70 = scmp.eq.s32.totalorder %s29, 0
      %p71 = por %p69, %p70
      %p72 = scmp.ne.s32.totalorder %s58, %s59
      %p73 = scmp.eq.s32.totalorder %s30, 7
      %p74 = por %p72, %p73
      %p76 = scmp.ne.s32.totalorder %s59, %s75
      %p77 = scmp.eq.s32.totalorder %s30, 0
      %p78 = por %p76, %p77
      %s79 = ssub.s32 %s31, %s50
      %s80 = ssub.s32 %s33, %s42
      %s81 = sor.u32 %s79, %s80
      %p82 = scmp.eq.s32.totalorder %s81, 0
      %s84 = sadd.s32 %s83, 1
      %s85 = scalar_select %p82, %s83, %s84
      %p88 = pneg %p82
      %p89 = scmp.eq.s32.totalorder %s24, 7
      %p90 = por %p88, %p89
      %p91 = scmp.ne.s32.totalorder %s83, %s86
      %p92 = scmp.eq.s32.totalorder %s24, 0
      %p93 = por %p91, %p92
      %p94 = scmp.ne.s32.totalorder %s83, %s86
      %p95 = scmp.eq.s32.totalorder %s29, 7
      %p96 = por %p94, %p95
      %p97 = scmp.ne.s32.totalorder %s86, %s87
      %p98 = scmp.eq.s32.totalorder %s29, 0
      %p99 = por %p97, %p98
      %p100 = scmp.ne.s32.totalorder %s86, %s87
      %p101 = scmp.eq.s32.totalorder %s30, 7
      %p102 = por %p100, %p101
      %p104 = scmp.ne.s32.totalorder %s87, %s103
      %p105 = scmp.eq.s32.totalorder %s30, 0
      %p106 = por %p104, %p105
      %s107 = ssub.s32 %s31, %s50
      %s108 = ssub.s32 %s33, %s42
      %s109 = sor.u32 %s107, %s108
      %p110 = scmp.eq.s32.totalorder %s109, 0
      %s112 = sadd.s32 %s111, 1
      %s113 = scalar_select %p110, %s111, %s112
      %p116 = pneg %p110
      %p117 = scmp.eq.s32.totalorder %s24, 7
      %p118 = por %p116, %p117
      %p119 = scmp.ne.s32.totalorder %s111, %s114
      %p120 = scmp.eq.s32.totalorder %s24, 0
      %p121 = por %p119, %p120
      %p122 = scmp.ne.s32.totalorder %s111, %s114
      %p123 = scmp.eq.s32.totalorder %s29, 7
      %p124 = por %p122, %p123
      %p125 = scmp.ne.s32.totalorder %s114, %s115
      %p126 = scmp.eq.s32.totalorder %s29, 0
      %p127 = por %p125, %p126
      %p128 = scmp.ne.s32.totalorder %s114, %s115
      %p129 = scmp.eq.s32.totalorder %s30, 7
      %p130 = por %p128, %p129
      %p132 = scmp.ne.s32.totalorder %s115, %s131
      %p133 = scmp.eq.s32.totalorder %s30, 0
      %p134 = por %p132, %p133
      %s136 = sadd.s32 %s135, 1
      %p139 = scmp.eq.s32.totalorder %s24, 7
      %p140 = scmp.ne.s32.totalorder %s135, %s137
      %p141 = scmp.eq.s32.totalorder %s24, 0
      %p142 = por %p140, %p141
      %p143 = scmp.ne.s32.totalorder %s135, %s137
      %p144 = scmp.eq.s32.totalorder %s29, 7
      %p145 = por %p143, %p144
      %p146 = scmp.ne.s32.totalorder %s137, %s138
      %p147 = scmp.eq.s32.totalorder %s29, 0
      %p148 = por %p146, %p147
      %p149 = scmp.ne.s32.totalorder %s137, %s138
      %p150 = scmp.eq.s32.totalorder %s30, 7
      %p151 = por %p149, %p150
      %p153 = scmp.ne.s32.totalorder %s138, %s152
      %p154 = scmp.eq.s32.totalorder %s30, 0
      %p155 = por %p153, %p154
      %s157 = sadd.s32 %s156, 1
      %p160 = scmp.eq.s32.totalorder %s24, 7
      %p161 = scmp.ne.s32.totalorder %s156, %s158
      %p162 = scmp.eq.s32.totalorder %s24, 0
      %p163 = por %p161, %p162
      %p164 = scmp.ne.s32.totalorder %s156, %s158
      %p165 = scmp.eq.s32.totalorder %s29, 7
      %p166 = por %p164, %p165
      %p167 = scmp.ne.s32.totalorder %s158, %s159
      %p168 = scmp.eq.s32.totalorder %s29, 0
      %p169 = por %p167, %p168
      %p170 = scmp.ne.s32.totalorder %s158, %s159
      %p171 = scmp.eq.s32.totalorder %s30, 7
      %p172 = por %p170, %p171
      %p174 = scmp.ne.s32.totalorder %s159, %s173
      %p175 = scmp.eq.s32.totalorder %s30, 0
      %p176 = por %p174, %p175
      %s178 = sadd.s32 %s177, 1
      %p181 = scmp.eq.s32.totalorder %s24, 7
      %p182 = scmp.ne.s32.totalorder %s177, %s179
      %p183 = scmp.eq.s32.totalorder %s24, 0
      %p184 = por %p182, %p183
      %p185 = scmp.ne.s32.totalorder %s177, %s179
      %p186 = scmp.eq.s32.totalorder %s29, 7
      %p187 = por %p185, %p186
      %p188 = scmp.ne.s32.totalorder %s179, %s180
      %p189 = scmp.eq.s32.totalorder %s29, 0
      %p190 = por %p188, %p189
      %p191 = scmp.ne.s32.totalorder %s179, %s180
      %p192 = scmp.eq.s32.totalorder %s30, 7
      %p193 = por %p191, %p192
      %p195 = scmp.ne.s32.totalorder %s180, %s194
      %p196 = scmp.eq.s32.totalorder %s30, 0
      %p197 = por %p195, %p196
      %s199 = sadd.s32 %s198, 1
      %p202 = scmp.eq.s32.totalorder %s24, 7
      %p203 = scmp.ne.s32.totalorder %s198, %s200
      %p204 = scmp.eq.s32.totalorder %s24, 0
      %p205 = por %p203, %p204
      %p206 = scmp.ne.s32.totalorder %s198, %s200
      %p207 = scmp.eq.s32.totalorder %s29, 7
      %p208 = por %p206, %p207
      %p209 = scmp.ne.s32.totalorder %s200, %s201
      %p210 = scmp.eq.s32.totalorder %s29, 0
      %p211 = por %p209, %p210
      %p212 = scmp.ne.s32.totalorder %s200, %s201
      %p213 = scmp.eq.s32.totalorder %s30, 7
      %p214 = por %p212, %p213
      %p216 = scmp.ne.s32.totalorder %s201, %s215
      %p217 = scmp.eq.s32.totalorder %s30, 0
      %p218 = por %p216, %p217
      %s219 = ssub.s32 %s31, %s50
      %s220 = ssub.s32 %s32, %s46
      %s221 = sor.u32 %s219, %s220
      %p222 = scmp.eq.s32.totalorder %s221, 0
      %s224 = sadd.s32 %s223, 1
      %s225 = scalar_select %p222, %s223, %s224
      %p228 = pneg %p222
      %p229 = scmp.eq.s32.totalorder %s24, 7
      %p230 = por %p228, %p229
      %p231 = scmp.ne.s32.totalorder %s223, %s226
      %p232 = scmp.eq.s32.totalorder %s24, 0
      %p233 = por %p231, %p232
      %p234 = scmp.ne.s32.totalorder %s223, %s226
      %p235 = scmp.eq.s32.totalorder %s29, 7
      %p236 = por %p234, %p235
      %p237 = scmp.ne.s32.totalorder %s226, %s227
      %p238 = scmp.eq.s32.totalorder %s29, 0
      %p239 = por %p237, %p238
      %p240 = scmp.ne.s32.totalorder %s226, %s227
      %p241 = scmp.eq.s32.totalorder %s30, 7
      %p242 = por %p240, %p241
      %p244 = scmp.ne.s32.totalorder %s227, %s243
      %p245 = scmp.eq.s32.totalorder %s30, 0
      %p246 = por %p244, %p245
      %p247 = scmp.le.s32.totalorder 1, %s24
      %p248 = scmp.lt.s32.totalorder %s24, 9
      %p249 = pnand %p247, %p248
      %p250 = pneg %p249
      // Predicated region
      $region9: #{tpu_custom_call.1} parent=5 // pred_check
        _
      $region10: #{tpu_custom_call.1} parent=5 // pred_check_branch
        %252 = sbr.rel (%p249) target = $region12
      $region11: #{tpu_custom_call.1} parent=5 // pred_region
        %s253 = ssub.s32 %s24, 1
        // Predicated region
        $region13: #{tpu_custom_call.1} parent=11 // pred_check
          %p254 = pneg %p148
        $region14: #{tpu_custom_call.1} parent=11 // pred_check_branch
          %256 = sbr.rel (%p254) target = $region16
        $region15: #{tpu_custom_call.1} parent=11 // pred_region
          _
        $region16: #{tpu_custom_call.1} parent=11 // pred_fallthru
          _
        // Predicated region
        $region17: #{tpu_custom_call.1} parent=11 // pred_check
          %p257 = pneg %p169
        $region18: #{tpu_custom_call.1} parent=11 // pred_check_branch
          %259 = sbr.rel (%p257) target = $region20
        $region19: #{tpu_custom_call.1} parent=11 // pred_region
          %261 = vsyncadd [#allocation14], 0
          %s262 = sshll.u32 %s4, 4
          %s263 = int_to_ptr.hbm [resolvable:$true] %s262
          %s264 = sshll.u32 [#allocation13], 4
          %s265 = int_to_ptr.vmem [resolvable:$true] %s264
          %270 = dma.hbm_to_vmem [thread:$0]  %s263, 512, %s265, [#allocation14], 64, 64, 4
        $region20: #{tpu_custom_call.1} parent=11 // pred_fallthru
          _
        // Predicated region
        $region21: #{tpu_custom_call.1} parent=11 // pred_check
          %p271 = pneg %p190
        $region22: #{tpu_custom_call.1} parent=11 // pred_check_branch
          %273 = sbr.rel (%p271) target = $region24
        $region23: #{tpu_custom_call.1} parent=11 // pred_region
          _
        $region24: #{tpu_custom_call.1} parent=11 // pred_fallthru
          _
        // Predicated region
        $region25: #{tpu_custom_call.1} parent=11 // pred_check
          %p274 = pneg %p211
        $region26: #{tpu_custom_call.1} parent=11 // pred_check_branch
          %276 = sbr.rel (%p274) target = $region28
        $region27: #{tpu_custom_call.1} parent=11 // pred_region
          _
        $region28: #{tpu_custom_call.1} parent=11 // pred_fallthru
          _
      $region12: #{tpu_custom_call.1} parent=5 // pred_fallthru
        _
      %p277 = scmp.lt.s32.totalorder %s24, 8
      // Predicated region
      $region29: #{tpu_custom_call.1} parent=5 // pred_check
        %p278 = pneg %p277
      $region30: #{tpu_custom_call.1} parent=5 // pred_check_branch
        %280 = sbr.rel (%p278) target = $region32
      $region31: #{tpu_custom_call.1} parent=5 // pred_region
        // Predicated region
        $region33: #{tpu_custom_call.1} parent=31 // pred_check
          %p281 = pneg %p65
        $region34: #{tpu_custom_call.1} parent=31 // pred_check_branch
          %283 = sbr.rel (%p281) target = $region36
        $region35: #{tpu_custom_call.1} parent=31 // pred_region
          %s284 = sand.u32 %s55, 1
          %s285 = scalar_lea.sflag [#allocation8], %s284
          %s286 = sand.u32 %s55, 1
          %s287 = smul.addr %s286, 64
          %s288 = scalar_lea.vmem [#allocation7], %s287
          %290 = vsyncadd %s285, 0
          %s291 = smul.addr %s31, 16
          %s292 = sadd.s32 %s32, %s291
          %s293 = smul.addr %s292, 8
          %s294 = scalar_lea.hbm %s0, %s293
          %s295 = sshll.u32 %s294, 4
          %s296 = int_to_ptr.hbm [resolvable:$true] %s295
          %s297 = sshll.u32 %s288, 4
          %s298 = int_to_ptr.vmem [resolvable:$true] %s297
          %303 = dma.hbm_to_vmem [thread:$0]  %s296, 1024, %s298, %s285, 256, 128, 8
        $region36: #{tpu_custom_call.1} parent=31 // pred_fallthru
          _
        // Predicated region
        $region37: #{tpu_custom_call.1} parent=31 // pred_check
          %p304 = pneg %p93
        $region38: #{tpu_custom_call.1} parent=31 // pred_check_branch
          %306 = sbr.rel (%p304) target = $region40
        $region39: #{tpu_custom_call.1} parent=31 // pred_region
          %s307 = sand.u32 %s24, 1
          %s308 = scalar_lea.sflag [#allocation11], %s307
          %s309 = sand.u32 %s83, 1
          %s310 = smul.addr %s309, 32
          %s311 = scalar_lea.vmem [#allocation10], %s310
          %313 = vsyncadd %s308, 0
          %s314 = smul.addr %s31, 16
          %s315 = sadd.s32 %s33, %s314
          %s316 = smul.addr %s315, 4
          %s317 = scalar_lea.hbm %s1, %s316
          %s318 = sshll.u32 %s317, 4
          %s319 = int_to_ptr.hbm [resolvable:$true] %s318
          %s320 = sshll.u32 %s311, 4
          %s321 = int_to_ptr.vmem [resolvable:$true] %s320
          %326 = dma.hbm_to_vmem [thread:$0]  %s319, 512, %s321, %s308, 128, 64, 4
        $region40: #{tpu_custom_call.1} parent=31 // pred_fallthru
          _
        // Predicated region
        $region41: #{tpu_custom_call.1} parent=31 // pred_check
          %p327 = pneg %p121
        $region42: #{tpu_custom_call.1} parent=31 // pred_check_branch
          %329 = sbr.rel (%p327) target = $region44
        $region43: #{tpu_custom_call.1} parent=31 // pred_region
          %s330 = sand.u32 %s24, 1
          %s331 = scalar_lea.sflag [#allocation11], %s330
          %s332 = sand.u32 %s111, 1
          %s333 = scalar_lea.vmem [#allocation12], %s332
          %335 = vsyncadd %s331, 0
          %s336 = smul.addr %s31, 2
          %s337 = sadd.s32 %s33, %s336
          %s338 = scalar_lea.hbm %s2, %s337
          %s340 = sshll.u32 %s338, 4
          %s341 = int_to_ptr.hbm [resolvable:$true] %s340
          %s342 = sshll.u32 %s333, 4
          %s343 = int_to_ptr.vmem [resolvable:$true] %s342
          %345 = dma.hbm_to_vmem [thread:$0]  %s341, 16, %s343, %s331
        $region44: #{tpu_custom_call.1} parent=31 // pred_fallthru
          _
      $region32: #{tpu_custom_call.1} parent=5 // pred_fallthru
        _
      %p346 = scmp.le.s32.totalorder 1, %s24
      %p347 = scmp.lt.s32.totalorder %s24, 9
      %p348 = pnand %p346, %p347
      %p349 = pneg %p348
      // Predicated region
      $region45: #{tpu_custom_call.1} parent=5 // pred_check
        _
      $region46: #{tpu_custom_call.1} parent=5 // pred_check_branch
        %351 = sbr.rel (%p348) target = $region48
      $region47: #{tpu_custom_call.1} parent=5 // pred_region
        %s352 = ssub.s32 %s24, 1
        %s353 = sand.u32 %s58, 1
        %s354 = scalar_lea.sflag [#allocation8], %s353
        %s355 = sand.u32 %s58, 1
        %s356 = smul.addr %s355, 64
        %s357 = scalar_lea.vmem [#allocation7], %s356
        // Predicated region
        $region49: #{tpu_custom_call.1} parent=47 // pred_check
          %p358 = pneg %p71
        $region50: #{tpu_custom_call.1} parent=47 // pred_check_branch
          %360 = sbr.rel (%p358) target = $region52
        $region51: #{tpu_custom_call.1} parent=47 // pred_region
          %362 = dma.done %s354, 1024
        $region52: #{tpu_custom_call.1} parent=47 // pred_fallthru
          _
        %s363 = sand.u32 %s29, 1
        %s364 = scalar_lea.sflag [#allocation11], %s363
        %s365 = sand.u32 %s86, 1
        %s366 = smul.addr %s365, 32
        %s367 = scalar_lea.vmem [#allocation10], %s366
        // Predicated region
        $region53: #{tpu_custom_call.1} parent=47 // pred_check
          %p368 = pneg %p99
        $region54: #{tpu_custom_call.1} parent=47 // pred_check_branch
          %370 = sbr.rel (%p368) target = $region56
        $region55: #{tpu_custom_call.1} parent=47 // pred_region
          %372 = dma.done %s364, 512
        $region56: #{tpu_custom_call.1} parent=47 // pred_fallthru
          _
        %s373 = sand.u32 %s29, 1
        %s374 = scalar_lea.sflag [#allocation11], %s373
        %s375 = sand.u32 %s114, 1
        %s376 = scalar_lea.vmem [#allocation12], %s375
        // Predicated region
        $region57: #{tpu_custom_call.1} parent=47 // pred_check
          %p377 = pneg %p127
        $region58: #{tpu_custom_call.1} parent=47 // pred_check_branch
          %379 = sbr.rel (%p377) target = $region60
        $region59: #{tpu_custom_call.1} parent=47 // pred_region
          %381 = dma.done %s374, 16
        $region60: #{tpu_custom_call.1} parent=47 // pred_fallthru
          _
        // Predicated region
        $region61: #{tpu_custom_call.1} parent=47 // pred_check
          %p382 = pneg %p169
        $region62: #{tpu_custom_call.1} parent=47 // pred_check_branch
          %384 = sbr.rel (%p382) target = $region64
        $region63: #{tpu_custom_call.1} parent=47 // pred_region
          %386 = dma.done [#allocation14], 512
        $region64: #{tpu_custom_call.1} parent=47 // pred_fallthru
          _
        %s387 = sand.u32 %s58, 1
        %s388 = scalar_lea.sflag [#allocation8], %s387
        %s389 = sand.u32 %s58, 1
        %s390 = smul.addr %s389, 64
        %s391 = scalar_lea.vmem [#allocation7], %s390
        %p392 = pneg %p71
        %p393 = pneg %p68
        %s394 = sand.u32 %s29, 1
        %s395 = scalar_lea.sflag [#allocation11], %s394
        %s396 = sand.u32 %s86, 1
        %s397 = smul.addr %s396, 32
        %s398 = scalar_lea.vmem [#allocation10], %s397
        %p399 = pneg %p99
        %p400 = pneg %p96
        %s401 = sand.u32 %s29, 1
        %s402 = scalar_lea.sflag [#allocation11], %s401
        %s403 = sand.u32 %s114, 1
        %s404 = scalar_lea.vmem [#allocation12], %s403
        %p405 = pneg %p127
        %p406 = pneg %p124
        %p407 = pneg %p148
        %p408 = pneg %p145
        %p409 = pneg %p169
        %p410 = pneg %p166
        %p411 = pneg %p190
        %p412 = pneg %p187
        %p413 = pneg %p211
        %p414 = pneg %p208
        %p415 = pneg %p239
        %p416 = pneg %p236
        %s417 = sand.u32 %s226, 1
        %s418 = scalar_lea.sflag [#allocation9], %s417
        %s419 = sand.u32 %s226, 1
        %s420 = smul.addr %s419, 64
        %s421 = scalar_lea.vmem [#allocation15], %s420
        %p423 = scmp.eq.s32.totalorder %s36, 0
        // Predicated region
        $region65: #{tpu_custom_call.1} parent=47 // pred_check
          %p424 = pneg %p423
        $region66: #{tpu_custom_call.1} parent=47 // pred_check_branch
          %426 = sbr.rel (%p424) target = $region68
        $region67: #{tpu_custom_call.1} parent=47 // pred_region
          %v427 = vld [vmem:[%s357] sm:$0xff]
          %v428 = vld [vmem:[%s357 + $0x8] sm:$0xff]
          %v429 = vld [vmem:[%s357 + $0x10] sm:$0xff]
          %v430 = vld [vmem:[%s357 + $0x18] sm:$0xff]
          %v431 = vld [vmem:[%s357 + $0x20] sm:$0xff]
          %v432 = vld [vmem:[%s357 + $0x28] sm:$0xff]
          %v433 = vld [vmem:[%s357 + $0x30] sm:$0xff]
          %v434 = vld [vmem:[%s357 + $0x38] sm:$0xff]
          %v435 = vld [vmem:[%s3] sm:$0xff]
          %v436 = vld [vmem:[%s3 + $0x8] sm:$0xff]
          %v437 = vld [vmem:[%s3 + $0x10] sm:$0xff]
          %v438 = vld [vmem:[%s3 + $0x18] sm:$0xff]
          %v439 = vld [vmem:[%s3 + $0x20] sm:$0xff]
          %v440 = vld [vmem:[%s3 + $0x28] sm:$0xff]
          %v441 = vld [vmem:[%s3 + $0x30] sm:$0xff]
          %v442 = vld [vmem:[%s3 + $0x38] sm:$0xff]
          %443 = vxpose.xlu0.b32.start [1/16] %v427, 128
          %444 = vxpose.xlu0.b32.cont [2/16] %v428, 128
          %445 = vxpose.xlu0.b32.cont [3/16] %v429, 128
          %446 = vxpose.xlu0.b32.cont [4/16] %v430, 128
          %447 = vxpose.xlu0.b32.cont [5/16] %v431, 128
          %448 = vxpose.xlu0.b32.cont [6/16] %v432, 128
          %449 = vxpose.xlu0.b32.cont [7/16] %v433, 128
          %450 = vxpose.xlu0.b32.cont [8/16] %v434, 128
          %451 = vxpose.xlu0.b32.cont [9/16] 0.0, 128
          %452 = vxpose.xlu0.b32.cont [10/16] 0.0, 128
          %453 = vxpose.xlu0.b32.cont [11/16] 0.0, 128
          %454 = vxpose.xlu0.b32.cont [12/16] 0.0, 128
          %455 = vxpose.xlu0.b32.cont [13/16] 0.0, 128
          %456 = vxpose.xlu0.b32.cont [14/16] 0.0, 128
          %457 = vxpose.xlu0.b32.cont [15/16] 0.0, 128
          %458 = vxpose.xlu0.b32.end [16/16] 0.0, 128
          %v459 = vpop.trf.xlu0
          %v460 = vpop.trf.xlu0
          %v461 = vpop.trf.xlu0
          %v462 = vpop.trf.xlu0
          %v463 = vpop.trf.xlu0
          %v464 = vpop.trf.xlu0
          %v465 = vpop.trf.xlu0
          %v466 = vpop.trf.xlu0
          %v467 = vpop.trf.xlu0
          %v468 = vpop.trf.xlu0
          %v469 = vpop.trf.xlu0
          %v470 = vpop.trf.xlu0
          %v471 = vpop.trf.xlu0
          %v472 = vpop.trf.xlu0
          %v473 = vpop.trf.xlu0
          %v474 = vpop.trf.xlu0
          %vm475 = vcmask 523264
          %v477 = vsel %vm475, %v459, 0
          %v480 = vsel %vm475, %v460, 0
          %v483 = vsel %vm475, %v461, 0
          %v486 = vsel %vm475, %v462, 0
          %v489 = vsel %vm475, %v463, 0
          %v492 = vsel %vm475, %v464, 0
          %v495 = vsel %vm475, %v465, 0
          %v498 = vsel %vm475, %v466, 0
          %v501 = vsel %vm475, %v467, 0
          %v504 = vsel %vm475, %v468, 0
          %v507 = vsel %vm475, %v469, 0
          %v510 = vsel %vm475, %v470, 0
          %v513 = vsel %vm475, %v471, 0
          %v516 = vsel %vm475, %v472, 0
          %v519 = vsel %vm475, %v473, 0
          %v522 = vsel %vm475, %v474, 0
          %524 = vmatpush.msra.mxu0 0.0
          %525 = vmatpush.msra.mxu0 0.0
          %526 = vmatpush.msra.mxu0 0.0
          %527 = vmatpush.msra.mxu0 0.0
          %528 = vmatpush.msra.mxu0 0.0
          %529 = vmatpush.msra.mxu0 0.0
          %530 = vmatpush.msra.mxu0 0.0
          %531 = vmatpush.msra.mxu0 0.0
          %532 = vmatpush.msra.mxu0 %v442
          %533 = vmatpush.msra.mxu0 %v441
          %534 = vmatpush.msra.mxu0 %v440
          %535 = vmatpush.msra.mxu0 %v439
          %536 = vmatpush.msra.mxu0 %v438
          %537 = vmatpush.msra.mxu0 %v437
          %538 = vmatpush.msra.mxu0 %v436
          %539 = vmatpush.msra.mxu0 %v435
          %540 = vmatmul.f32.gmra.mxu0 %v477
          %v541 = vpop.f32.mrf.mxu0
          %v542 = vadd.f32 0.0, %v541
          %543 = vmatmul.f32.gmra.mxu0 %v480
          %v544 = vpop.f32.mrf.mxu0
          %v545 = vadd.f32 0.0, %v544
          %546 = vmatmul.f32.gmra.mxu0 %v483
          %v547 = vpop.f32.mrf.mxu0
          %v548 = vadd.f32 0.0, %v547
          %549 = vmatmul.f32.gmra.mxu0 %v486
          %v550 = vpop.f32.mrf.mxu0
          %v551 = vadd.f32 0.0, %v550
          %552 = vmatmul.f32.gmra.mxu0 %v489
          %v553 = vpop.f32.mrf.mxu0
          %v554 = vadd.f32 0.0, %v553
          %555 = vmatmul.f32.gmra.mxu0 %v492
          %v556 = vpop.f32.mrf.mxu0
          %v557 = vadd.f32 0.0, %v556
          %558 = vmatmul.f32.gmra.mxu0 %v495
          %v559 = vpop.f32.mrf.mxu0
          %v560 = vadd.f32 0.0, %v559
          %561 = vmatmul.f32.gmra.mxu0 %v498
          %v562 = vpop.f32.mrf.mxu0
          %v563 = vadd.f32 0.0, %v562
          %564 = vmatmul.f32.gmra.mxu0 %v501
          %v565 = vpop.f32.mrf.mxu0
          %v566 = vadd.f32 0.0, %v565
          %567 = vmatmul.f32.gmra.mxu0 %v504
          %v568 = vpop.f32.mrf.mxu0
          %v569 = vadd.f32 0.0, %v568
          %570 = vmatmul.f32.gmra.mxu0 %v507
          %v571 = vpop.f32.mrf.mxu0
          %v572 = vadd.f32 0.0, %v571
          %573 = vmatmul.f32.gmra.mxu0 %v510
          %v574 = vpop.f32.mrf.mxu0
          %v575 = vadd.f32 0.0, %v574
          %576 = vmatmul.f32.gmra.mxu0 %v513
          %v577 = vpop.f32.mrf.mxu0
          %v578 = vadd.f32 0.0, %v577
          %579 = vmatmul.f32.gmra.mxu0 %v516
          %v580 = vpop.f32.mrf.mxu0
          %v581 = vadd.f32 0.0, %v580
          %582 = vmatmul.f32.gmra.mxu0 %v519
          %v583 = vpop.f32.mrf.mxu0
          %v584 = vadd.f32 0.0, %v583
          %585 = vmatmul.f32.gmra.mxu0 %v522
          %v586 = vpop.f32.mrf.mxu0
          %v587 = vadd.f32 0.0, %v586
          %588 = vdwg.mxu0
          %v589 = vpack.c.bf16 %v542, %v542
          %v590 = vpack.c.bf16 %v545, %v545
          %v591 = vpack.c.bf16 %v548, %v548
          %v592 = vpack.c.bf16 %v551, %v551
          %v593 = vpack.c.bf16 %v554, %v554
          %v594 = vpack.c.bf16 %v557, %v557
          %v595 = vpack.c.bf16 %v560, %v560
          %v596 = vpack.c.bf16 %v563, %v563
          %v597 = vpack.c.bf16 %v566, %v566
          %v598 = vpack.c.bf16 %v569, %v569
          %v599 = vpack.c.bf16 %v572, %v572
          %v600 = vpack.c.bf16 %v575, %v575
          %v601 = vpack.c.bf16 %v578, %v578
          %v602 = vpack.c.bf16 %v581, %v581
          %v603 = vpack.c.bf16 %v584, %v584
          %v604 = vpack.c.bf16 %v587, %v587
          %vm605 = vcmask 519168
          %606 = vst.msk [vmem:[#allocation2] sm:$0xf] %vm605, %v589
          %607 = vst.msk [vmem:[#allocation2 + $0x4] sm:$0xf] %vm605, %v590
          %608 = vst.msk [vmem:[#allocation2 + $0x8] sm:$0xf] %vm605, %v591
          %609 = vst.msk [vmem:[#allocation2 + $0xc] sm:$0xf] %vm605, %v592
          %610 = vst.msk [vmem:[#allocation2 + $0x10] sm:$0xf] %vm605, %v593
          %611 = vst.msk [vmem:[#allocation2 + $0x14] sm:$0xf] %vm605, %v594
          %612 = vst.msk [vmem:[#allocation2 + $0x18] sm:$0xf] %vm605, %v595
          %613 = vst.msk [vmem:[#allocation2 + $0x1c] sm:$0xf] %vm605, %v596
          %614 = vst.msk [vmem:[#allocation2 + $0x20] sm:$0xf] %vm605, %v597
          %615 = vst.msk [vmem:[#allocation2 + $0x24] sm:$0xf] %vm605, %v598
          %616 = vst.msk [vmem:[#allocation2 + $0x28] sm:$0xf] %vm605, %v599
          %617 = vst.msk [vmem:[#allocation2 + $0x2c] sm:$0xf] %vm605, %v600
          %618 = vst.msk [vmem:[#allocation2 + $0x30] sm:$0xf] %vm605, %v601
          %619 = vst.msk [vmem:[#allocation2 + $0x34] sm:$0xf] %vm605, %v602
          %620 = vst.msk [vmem:[#allocation2 + $0x38] sm:$0xf] %vm605, %v603
          %621 = vst.msk [vmem:[#allocation2 + $0x3c] sm:$0xf] %vm605, %v604
          %vm622 = vcmask 7168
          %623 = vst.msk [vmem:[#allocation3] sm:$0xff] %vm622, -inf
          %624 = vst.msk [vmem:[#allocation3 + $0x8] sm:$0xff] %vm622, -inf
          %625 = vst.msk [vmem:[#allocation3 + $0x10] sm:$0xff] %vm622, -inf
          %626 = vst.msk [vmem:[#allocation3 + $0x18] sm:$0xff] %vm622, -inf
          %627 = vst.msk [vmem:[#allocation3 + $0x20] sm:$0xff] %vm622, -inf
          %628 = vst.msk [vmem:[#allocation3 + $0x28] sm:$0xff] %vm622, -inf
          %629 = vst.msk [vmem:[#allocation3 + $0x30] sm:$0xff] %vm622, -inf
          %630 = vst.msk [vmem:[#allocation3 + $0x38] sm:$0xff] %vm622, -inf
          %631 = vst.msk [vmem:[#allocation3 + $0x40] sm:$0xff] %vm622, -inf
          %632 = vst.msk [vmem:[#allocation3 + $0x48] sm:$0xff] %vm622, -inf
          %633 = vst.msk [vmem:[#allocation3 + $0x50] sm:$0xff] %vm622, -inf
          %634 = vst.msk [vmem:[#allocation3 + $0x58] sm:$0xff] %vm622, -inf
          %635 = vst.msk [vmem:[#allocation3 + $0x60] sm:$0xff] %vm622, -inf
          %636 = vst.msk [vmem:[#allocation3 + $0x68] sm:$0xff] %vm622, -inf
          %637 = vst.msk [vmem:[#allocation3 + $0x70] sm:$0xff] %vm622, -inf
          %638 = vst.msk [vmem:[#allocation3 + $0x78] sm:$0xff] %vm622, -inf
          %639 = vst.msk [vmem:[#allocation4] sm:$0xff] %vm622, 0.0
          %640 = vst.msk [vmem:[#allocation4 + $0x8] sm:$0xff] %vm622, 0.0
          %641 = vst.msk [vmem:[#allocation4 + $0x10] sm:$0xff] %vm622, 0.0
          %642 = vst.msk [vmem:[#allocation4 + $0x18] sm:$0xff] %vm622, 0.0
          %643 = vst.msk [vmem:[#allocation4 + $0x20] sm:$0xff] %vm622, 0.0
          %644 = vst.msk [vmem:[#allocation4 + $0x28] sm:$0xff] %vm622, 0.0
          %645 = vst.msk [vmem:[#allocation4 + $0x30] sm:$0xff] %vm622, 0.0
          %646 = vst.msk [vmem:[#allocation4 + $0x38] sm:$0xff] %vm622, 0.0
          %647 = vst.msk [vmem:[#allocation4 + $0x40] sm:$0xff] %vm622, 0.0
          %648 = vst.msk [vmem:[#allocation4 + $0x48] sm:$0xff] %vm622, 0.0
          %649 = vst.msk [vmem:[#allocation4 + $0x50] sm:$0xff] %vm622, 0.0
          %650 = vst.msk [vmem:[#allocation4 + $0x58] sm:$0xff] %vm622, 0.0
          %651 = vst.msk [vmem:[#allocation4 + $0x60] sm:$0xff] %vm622, 0.0
          %652 = vst.msk [vmem:[#allocation4 + $0x68] sm:$0xff] %vm622, 0.0
          %653 = vst.msk [vmem:[#allocation4 + $0x70] sm:$0xff] %vm622, 0.0
          %654 = vst.msk [vmem:[#allocation4 + $0x78] sm:$0xff] %vm622, 0.0
          %655 = vst.msk [vmem:[#allocation5] sm:$0xff] %vm475, 0.0
          %656 = vst.msk [vmem:[#allocation5 + $0x8] sm:$0xff] %vm475, 0.0
          %657 = vst.msk [vmem:[#allocation5 + $0x10] sm:$0xff] %vm475, 0.0
          %658 = vst.msk [vmem:[#allocation5 + $0x18] sm:$0xff] %vm475, 0.0
          %659 = vst.msk [vmem:[#allocation5 + $0x20] sm:$0xff] %vm475, 0.0
          %660 = vst.msk [vmem:[#allocation5 + $0x28] sm:$0xff] %vm475, 0.0
          %661 = vst.msk [vmem:[#allocation5 + $0x30] sm:$0xff] %vm475, 0.0
          %662 = vst.msk [vmem:[#allocation5 + $0x38] sm:$0xff] %vm475, 0.0
          %663 = vst.msk [vmem:[#allocation5 + $0x40] sm:$0xff] %vm475, 0.0
          %664 = vst.msk [vmem:[#allocation5 + $0x48] sm:$0xff] %vm475, 0.0
          %665 = vst.msk [vmem:[#allocation5 + $0x50] sm:$0xff] %vm475, 0.0
          %666 = vst.msk [vmem:[#allocation5 + $0x58] sm:$0xff] %vm475, 0.0
          %667 = vst.msk [vmem:[#allocation5 + $0x60] sm:$0xff] %vm475, 0.0
          %668 = vst.msk [vmem:[#allocation5 + $0x68] sm:$0xff] %vm475, 0.0
          %669 = vst.msk [vmem:[#allocation5 + $0x70] sm:$0xff] %vm475, 0.0
          %670 = vst.msk [vmem:[#allocation5 + $0x78] sm:$0xff] %vm475, 0.0
        $region68: #{tpu_custom_call.1} parent=47 // pred_fallthru
          _
        %v671 = vld [vmem:[%s367] sm:$0xf]
        %v672 = vld [vmem:[%s367 + $0x4] sm:$0xf]
        %v673 = vld [vmem:[%s367 + $0x8] sm:$0xf]
        %v674 = vld [vmem:[%s367 + $0xc] sm:$0xf]
        %v675 = vld [vmem:[%s367 + $0x10] sm:$0xf]
        %v676 = vld [vmem:[%s367 + $0x14] sm:$0xf]
        %v677 = vld [vmem:[%s367 + $0x18] sm:$0xf]
        %v678 = vld [vmem:[%s367 + $0x1c] sm:$0xf]
        %v679 = vld [vmem:[#allocation2] sm:$0xf]
        %v680 = vld [vmem:[#allocation2 + $0x4] sm:$0xf]
        %v681 = vld [vmem:[#allocation2 + $0x8] sm:$0xf]
        %v682 = vld [vmem:[#allocation2 + $0xc] sm:$0xf]
        %v683 = vld [vmem:[#allocation2 + $0x10] sm:$0xf]
        %v684 = vld [vmem:[#allocation2 + $0x14] sm:$0xf]
        %v685 = vld [vmem:[#allocation2 + $0x18] sm:$0xf]
        %v686 = vld [vmem:[#allocation2 + $0x1c] sm:$0xf]
        %v687 = vld [vmem:[#allocation2 + $0x20] sm:$0xf]
        %v688 = vld [vmem:[#allocation2 + $0x24] sm:$0xf]
        %v689 = vld [vmem:[#allocation2 + $0x28] sm:$0xf]
        %v690 = vld [vmem:[#allocation2 + $0x2c] sm:$0xf]
        %v691 = vld [vmem:[#allocation2 + $0x30] sm:$0xf]
        %v692 = vld [vmem:[#allocation2 + $0x34] sm:$0xf]
        %v693 = vld [vmem:[#allocation2 + $0x38] sm:$0xf]
        %v694 = vld [vmem:[#allocation2 + $0x3c] sm:$0xf]
        %v695 = vld [vmem:[%s376] sm:$0x1]
        %v697 = vperm.slane %v695, 0
        %v715 = vunpack.c.l.b16 %v679
        %v716 = vunpack.c.l.b16 %v680
        %v717 = vunpack.c.l.b16 %v681
        %v718 = vunpack.c.l.b16 %v682
        %v719 = vunpack.c.l.b16 %v683
        %v720 = vunpack.c.l.b16 %v684
        %v721 = vunpack.c.l.b16 %v685
        %v722 = vunpack.c.l.b16 %v686
        %v723 = vunpack.c.l.b16 %v687
        %v724 = vunpack.c.l.b16 %v688
        %v725 = vunpack.c.l.b16 %v689
        %v726 = vunpack.c.l.b16 %v690
        %v727 = vunpack.c.l.b16 %v691
        %v728 = vunpack.c.l.b16 %v692
        %v729 = vunpack.c.l.b16 %v693
        %v730 = vunpack.c.l.b16 %v694
        %v731 = vpack.c.b16 %v716, %v715
        %v732 = vpack.c.b16 %v718, %v717
        %v733 = vpack.c.b16 %v720, %v719
        %v734 = vpack.c.b16 %v722, %v721
        %v735 = vpack.c.b16 %v724, %v723
        %v736 = vpack.c.b16 %v726, %v725
        %v737 = vpack.c.b16 %v728, %v727
        %v738 = vpack.c.b16 %v730, %v729
        %v747 = vunpack.c.l.b16 %v671
        %v748 = vunpack.c.l.b16 %v672
        %v749 = vunpack.c.l.b16 %v673
        %v750 = vunpack.c.l.b16 %v674
        %v751 = vunpack.c.l.b16 %v675
        %v752 = vunpack.c.l.b16 %v676
        %v753 = vunpack.c.l.b16 %v677
        %v754 = vunpack.c.l.b16 %v678
        %v755 = vpack.c.b16 %v748, %v747
        %v756 = vpack.c.b16 %v750, %v749
        %v757 = vpack.c.b16 %v752, %v751
        %v758 = vpack.c.b16 %v754, %v753
        %vm763 = vcmask 523264
        %v765 = vsel %vm763, %v731, 0
        %v768 = vsel %vm763, %v732, 0
        %v771 = vsel %vm763, %v733, 0
        %v774 = vsel %vm763, %v734, 0
        %v777 = vsel %vm763, %v735, 0
        %v780 = vsel %vm763, %v736, 0
        %v783 = vsel %vm763, %v737, 0
        %v786 = vsel %vm763, %v738, 0
        %788 = vmatpush.bf16.msra.mxu0 0
        %789 = vmatpush.bf16.msra.mxu0 0
        %790 = vmatpush.bf16.msra.mxu0 0
        %791 = vmatpush.bf16.msra.mxu0 0
        %792 = vmatpush.bf16.msra.mxu0 %v758
        %793 = vmatpush.bf16.msra.mxu0 %v757
        %794 = vmatpush.bf16.msra.mxu0 %v756
        %795 = vmatpush.bf16.msra.mxu0 %v755
        %796 = vmatmul.bf16.gmra.mxu0 %v765
        %v797 = vpop.f32.mrf.mxu0
        %v798 = vadd.f32 %v697, %v797
        %v799 = vpop.f32.mrf.mxu0
        %v800 = vadd.f32 %v697, %v799
        %801 = vmatmul.bf16.gmra.mxu0 %v768
        %v802 = vpop.f32.mrf.mxu0
        %v803 = vadd.f32 %v697, %v802
        %v804 = vpop.f32.mrf.mxu0
        %v805 = vadd.f32 %v697, %v804
        %806 = vmatmul.bf16.gmra.mxu0 %v771
        %v807 = vpop.f32.mrf.mxu0
        %v808 = vadd.f32 %v697, %v807
        %v809 = vpop.f32.mrf.mxu0
        %v810 = vadd.f32 %v697, %v809
        %811 = vmatmul.bf16.gmra.mxu0 %v774
        %v812 = vpop.f32.mrf.mxu0
        %v813 = vadd.f32 %v697, %v812
        %v814 = vpop.f32.mrf.mxu0
        %v815 = vadd.f32 %v697, %v814
        %816 = vmatmul.bf16.gmra.mxu0 %v777
        %v817 = vpop.f32.mrf.mxu0
        %v818 = vadd.f32 %v697, %v817
        %v819 = vpop.f32.mrf.mxu0
        %v820 = vadd.f32 %v697, %v819
        %821 = vmatmul.bf16.gmra.mxu0 %v780
        %v822 = vpop.f32.mrf.mxu0
        %v823 = vadd.f32 %v697, %v822
        %v824 = vpop.f32.mrf.mxu0
        %v825 = vadd.f32 %v697, %v824
        %826 = vmatmul.bf16.gmra.mxu0 %v783
        %v827 = vpop.f32.mrf.mxu0
        %v828 = vadd.f32 %v697, %v827
        %v829 = vpop.f32.mrf.mxu0
        %v830 = vadd.f32 %v697, %v829
        %831 = vmatmul.bf16.gmra.mxu0 %v786
        %v832 = vpop.f32.mrf.mxu0
        %v833 = vadd.f32 %v697, %v832
        %v834 = vpop.f32.mrf.mxu0
        %v835 = vadd.f32 %v697, %v834
        %836 = vdwg.mxu0
        %v837 = vld [vmem:[#allocation3] sm:$0xff]
        %v838 = vld [vmem:[#allocation3 + $0x8] sm:$0xff]
        %v839 = vld [vmem:[#allocation3 + $0x10] sm:$0xff]
        %v840 = vld [vmem:[#allocation3 + $0x18] sm:$0xff]
        %v841 = vld [vmem:[#allocation3 + $0x20] sm:$0xff]
        %v842 = vld [vmem:[#allocation3 + $0x28] sm:$0xff]
        %v843 = vld [vmem:[#allocation3 + $0x30] sm:$0xff]
        %v844 = vld [vmem:[#allocation3 + $0x38] sm:$0xff]
        %v845 = vld [vmem:[#allocation3 + $0x40] sm:$0xff]
        %v846 = vld [vmem:[#allocation3 + $0x48] sm:$0xff]
        %v847 = vld [vmem:[#allocation3 + $0x50] sm:$0xff]
        %v848 = vld [vmem:[#allocation3 + $0x58] sm:$0xff]
        %v849 = vld [vmem:[#allocation3 + $0x60] sm:$0xff]
        %v850 = vld [vmem:[#allocation3 + $0x68] sm:$0xff]
        %v851 = vld [vmem:[#allocation3 + $0x70] sm:$0xff]
        %v852 = vld [vmem:[#allocation3 + $0x78] sm:$0xff]
        %853 = vmax.xlane.f32.xlu0 %v798
        %v854 = vpop.xlane.xlu0 %853
        %855 = vmax.xlane.f32.xlu0 %v800
        %v856 = vpop.xlane.xlu0 %855
        %857 = vmax.xlane.f32.xlu0 %v803
        %v858 = vpop.xlane.xlu0 %857
        %859 = vmax.xlane.f32.xlu0 %v805
        %v860 = vpop.xlane.xlu0 %859
        %861 = vmax.xlane.f32.xlu0 %v808
        %v862 = vpop.xlane.xlu0 %861
        %863 = vmax.xlane.f32.xlu0 %v810
        %v864 = vpop.xlane.xlu0 %863
        %865 = vmax.xlane.f32.xlu0 %v813
        %v866 = vpop.xlane.xlu0 %865
        %867 = vmax.xlane.f32.xlu0 %v815
        %v868 = vpop.xlane.xlu0 %867
        %869 = vmax.xlane.f32.xlu0 %v818
        %v870 = vpop.xlane.xlu0 %869
        %871 = vmax.xlane.f32.xlu0 %v820
        %v872 = vpop.xlane.xlu0 %871
        %873 = vmax.xlane.f32.xlu0 %v823
        %v874 = vpop.xlane.xlu0 %873
        %875 = vmax.xlane.f32.xlu0 %v825
        %v876 = vpop.xlane.xlu0 %875
        %877 = vmax.xlane.f32.xlu0 %v828
        %v878 = vpop.xlane.xlu0 %877
        %879 = vmax.xlane.f32.xlu0 %v830
        %v880 = vpop.xlane.xlu0 %879
        %881 = vmax.xlane.f32.xlu0 %v833
        %v882 = vpop.xlane.xlu0 %881
        %883 = vmax.xlane.f32.xlu0 %v835
        %v884 = vpop.xlane.xlu0 %883
        %v885 = vmax.f32 %v837, %v854
        %v886 = vmax.f32 %v838, %v856
        %v887 = vmax.f32 %v839, %v858
        %v888 = vmax.f32 %v840, %v860
        %v889 = vmax.f32 %v841, %v862
        %v890 = vmax.f32 %v842, %v864
        %v891 = vmax.f32 %v843, %v866
        %v892 = vmax.f32 %v844, %v868
        %v893 = vmax.f32 %v845, %v870
        %v894 = vmax.f32 %v846, %v872
        %v895 = vmax.f32 %v847, %v874
        %v896 = vmax.f32 %v848, %v876
        %v897 = vmax.f32 %v849, %v878
        %v898 = vmax.f32 %v850, %v880
        %v899 = vmax.f32 %v851, %v882
        %v900 = vmax.f32 %v852, %v884
        %v901 = vsub.f32 %v837, %v885
        %v902 = vsub.f32 %v838, %v886
        %v903 = vsub.f32 %v839, %v887
        %v904 = vsub.f32 %v840, %v888
        %v905 = vsub.f32 %v841, %v889
        %v906 = vsub.f32 %v842, %v890
        %v907 = vsub.f32 %v843, %v891
        %v908 = vsub.f32 %v844, %v892
        %v909 = vsub.f32 %v845, %v893
        %v910 = vsub.f32 %v846, %v894
        %v911 = vsub.f32 %v847, %v895
        %v912 = vsub.f32 %v848, %v896
        %v913 = vsub.f32 %v849, %v897
        %v914 = vsub.f32 %v850, %v898
        %v915 = vsub.f32 %v851, %v899
        %v916 = vsub.f32 %v852, %v900
        %v917 = vmul.f32 %v901, 1.442695
        %v918 = vpow.pop %v917
        %v919 = vmul.f32 %v902, 1.442695
        %v920 = vpow.pop %v919
        %v921 = vmul.f32 %v903, 1.442695
        %v922 = vpow.pop %v921
        %v923 = vmul.f32 %v904, 1.442695
        %v924 = vpow.pop %v923
        %v925 = vmul.f32 %v905, 1.442695
        %v926 = vpow.pop %v925
        %v927 = vmul.f32 %v906, 1.442695
        %v928 = vpow.pop %v927
        %v929 = vmul.f32 %v907, 1.442695
        %v930 = vpow.pop %v929
        %v931 = vmul.f32 %v908, 1.442695
        %v932 = vpow.pop %v931
        %v933 = vmul.f32 %v909, 1.442695
        %v934 = vpow.pop %v933
        %v935 = vmul.f32 %v910, 1.442695
        %v936 = vpow.pop %v935
        %v937 = vmul.f32 %v911, 1.442695
        %v938 = vpow.pop %v937
        %v939 = vmul.f32 %v912, 1.442695
        %v940 = vpow.pop %v939
        %v941 = vmul.f32 %v913, 1.442695
        %v942 = vpow.pop %v941
        %v943 = vmul.f32 %v914, 1.442695
        %v944 = vpow.pop %v943
        %v945 = vmul.f32 %v915, 1.442695
        %v946 = vpow.pop %v945
        %v947 = vmul.f32 %v916, 1.442695
        %v948 = vpow.pop %v947
        %950 = vset.pattern.permute.xlu0 0
        %951 = vperm.xlu0 %950, %v885
        %v952 = vpop.permute.xlu0 %951
        %955 = vset.pattern.permute.xlu0 0
        %956 = vperm.xlu0 %955, %v886
        %v957 = vpop.permute.xlu0 %956
        %960 = vset.pattern.permute.xlu0 0
        %961 = vperm.xlu0 %960, %v887
        %v962 = vpop.permute.xlu0 %961
        %965 = vset.pattern.permute.xlu0 0
        %966 = vperm.xlu0 %965, %v888
        %v967 = vpop.permute.xlu0 %966
        %970 = vset.pattern.permute.xlu0 0
        %971 = vperm.xlu0 %970, %v889
        %v972 = vpop.permute.xlu0 %971
        %975 = vset.pattern.permute.xlu0 0
        %976 = vperm.xlu0 %975, %v890
        %v977 = vpop.permute.xlu0 %976
        %980 = vset.pattern.permute.xlu0 0
        %981 = vperm.xlu0 %980, %v891
        %v982 = vpop.permute.xlu0 %981
        %985 = vset.pattern.permute.xlu0 0
        %986 = vperm.xlu0 %985, %v892
        %v987 = vpop.permute.xlu0 %986
        %990 = vset.pattern.permute.xlu0 0
        %991 = vperm.xlu0 %990, %v893
        %v992 = vpop.permute.xlu0 %991
        %995 = vset.pattern.permute.xlu0 0
        %996 = vperm.xlu0 %995, %v894
        %v997 = vpop.permute.xlu0 %996
        %1000 = vset.pattern.permute.xlu0 0
        %1001 = vperm.xlu0 %1000, %v895
        %v1002 = vpop.permute.xlu0 %1001
        %1005 = vset.pattern.permute.xlu0 0
        %1006 = vperm.xlu0 %1005, %v896
        %v1007 = vpop.permute.xlu0 %1006
        %1010 = vset.pattern.permute.xlu0 0
        %1011 = vperm.xlu0 %1010, %v897
        %v1012 = vpop.permute.xlu0 %1011
        %1015 = vset.pattern.permute.xlu0 0
        %1016 = vperm.xlu0 %1015, %v898
        %v1017 = vpop.permute.xlu0 %1016
        %1020 = vset.pattern.permute.xlu0 0
        %1021 = vperm.xlu0 %1020, %v899
        %v1022 = vpop.permute.xlu0 %1021
        %1025 = vset.pattern.permute.xlu0 0
        %1026 = vperm.xlu0 %1025, %v900
        %v1027 = vpop.permute.xlu0 %1026
        %v1029 = vsub.f32 %v798, %v952
        %v1030 = vsub.f32 %v800, %v957
        %v1031 = vsub.f32 %v803, %v962
        %v1032 = vsub.f32 %v805, %v967
        %v1033 = vsub.f32 %v808, %v972
        %v1034 = vsub.f32 %v810, %v977
        %v1035 = vsub.f32 %v813, %v982
        %v1036 = vsub.f32 %v815, %v987
        %v1037 = vsub.f32 %v818, %v992
        %v1038 = vsub.f32 %v820, %v997
        %v1039 = vsub.f32 %v823, %v1002
        %v1040 = vsub.f32 %v825, %v1007
        %v1041 = vsub.f32 %v828, %v1012
        %v1042 = vsub.f32 %v830, %v1017
        %v1043 = vsub.f32 %v833, %v1022
        %v1044 = vsub.f32 %v835, %v1027
        %v1045 = vmul.f32 %v1029, 1.442695
        %v1046 = vpow.pop %v1045
        %v1047 = vmul.f32 %v1030, 1.442695
        %v1048 = vpow.pop %v1047
        %v1049 = vmul.f32 %v1031, 1.442695
        %v1050 = vpow.pop %v1049
        %v1051 = vmul.f32 %v1032, 1.442695
        %v1052 = vpow.pop %v1051
        %v1053 = vmul.f32 %v1033, 1.442695
        %v1054 = vpow.pop %v1053
        %v1055 = vmul.f32 %v1034, 1.442695
        %v1056 = vpow.pop %v1055
        %v1057 = vmul.f32 %v1035, 1.442695
        %v1058 = vpow.pop %v1057
        %v1059 = vmul.f32 %v1036, 1.442695
        %v1060 = vpow.pop %v1059
        %v1061 = vmul.f32 %v1037, 1.442695
        %v1062 = vpow.pop %v1061
        %v1063 = vmul.f32 %v1038, 1.442695
        %v1064 = vpow.pop %v1063
        %v1065 = vmul.f32 %v1039, 1.442695
        %v1066 = vpow.pop %v1065
        %v1067 = vmul.f32 %v1040, 1.442695
        %v1068 = vpow.pop %v1067
        %v1069 = vmul.f32 %v1041, 1.442695
        %v1070 = vpow.pop %v1069
        %v1071 = vmul.f32 %v1042, 1.442695
        %v1072 = vpow.pop %v1071
        %v1073 = vmul.f32 %v1043, 1.442695
        %v1074 = vpow.pop %v1073
        %v1075 = vmul.f32 %v1044, 1.442695
        %v1076 = vpow.pop %v1075
        %v1077 = vld [vmem:[#allocation4] sm:$0xff]
        %v1078 = vld [vmem:[#allocation4 + $0x8] sm:$0xff]
        %v1079 = vld [vmem:[#allocation4 + $0x10] sm:$0xff]
        %v1080 = vld [vmem:[#allocation4 + $0x18] sm:$0xff]
        %v1081 = vld [vmem:[#allocation4 + $0x20] sm:$0xff]
        %v1082 = vld [vmem:[#allocation4 + $0x28] sm:$0xff]
        %v1083 = vld [vmem:[#allocation4 + $0x30] sm:$0xff]
        %v1084 = vld [vmem:[#allocation4 + $0x38] sm:$0xff]
        %v1085 = vld [vmem:[#allocation4 + $0x40] sm:$0xff]
        %v1086 = vld [vmem:[#allocation4 + $0x48] sm:$0xff]
        %v1087 = vld [vmem:[#allocation4 + $0x50] sm:$0xff]
        %v1088 = vld [vmem:[#allocation4 + $0x58] sm:$0xff]
        %v1089 = vld [vmem:[#allocation4 + $0x60] sm:$0xff]
        %v1090 = vld [vmem:[#allocation4 + $0x68] sm:$0xff]
        %v1091 = vld [vmem:[#allocation4 + $0x70] sm:$0xff]
        %v1092 = vld [vmem:[#allocation4 + $0x78] sm:$0xff]
        %v1093 = vmul.f32 %v918, %v1077
        %v1094 = vmul.f32 %v920, %v1078
        %v1095 = vmul.f32 %v922, %v1079
        %v1096 = vmul.f32 %v924, %v1080
        %v1097 = vmul.f32 %v926, %v1081
        %v1098 = vmul.f32 %v928, %v1082
        %v1099 = vmul.f32 %v930, %v1083
        %v1100 = vmul.f32 %v932, %v1084
        %v1101 = vmul.f32 %v934, %v1085
        %v1102 = vmul.f32 %v936, %v1086
        %v1103 = vmul.f32 %v938, %v1087
        %v1104 = vmul.f32 %v940, %v1088
        %v1105 = vmul.f32 %v942, %v1089
        %v1106 = vmul.f32 %v944, %v1090
        %v1107 = vmul.f32 %v946, %v1091
        %v1108 = vmul.f32 %v948, %v1092
        %1109 = vadd.xlane.f32.xlu0 %v1046
        %v1110 = vpop.xlane.xlu0 %1109
        %1111 = vadd.xlane.f32.xlu0 %v1048
        %v1112 = vpop.xlane.xlu0 %1111
        %1113 = vadd.xlane.f32.xlu0 %v1050
        %v1114 = vpop.xlane.xlu0 %1113
        %1115 = vadd.xlane.f32.xlu0 %v1052
        %v1116 = vpop.xlane.xlu0 %1115
        %1117 = vadd.xlane.f32.xlu0 %v1054
        %v1118 = vpop.xlane.xlu0 %1117
        %1119 = vadd.xlane.f32.xlu0 %v1056
        %v1120 = vpop.xlane.xlu0 %1119
        %1121 = vadd.xlane.f32.xlu0 %v1058
        %v1122 = vpop.xlane.xlu0 %1121
        %1123 = vadd.xlane.f32.xlu0 %v1060
        %v1124 = vpop.xlane.xlu0 %1123
        %1125 = vadd.xlane.f32.xlu0 %v1062
        %v1126 = vpop.xlane.xlu0 %1125
        %1127 = vadd.xlane.f32.xlu0 %v1064
        %v1128 = vpop.xlane.xlu0 %1127
        %1129 = vadd.xlane.f32.xlu0 %v1066
        %v1130 = vpop.xlane.xlu0 %1129
        %1131 = vadd.xlane.f32.xlu0 %v1068
        %v1132 = vpop.xlane.xlu0 %1131
        %1133 = vadd.xlane.f32.xlu0 %v1070
        %v1134 = vpop.xlane.xlu0 %1133
        %1135 = vadd.xlane.f32.xlu0 %v1072
        %v1136 = vpop.xlane.xlu0 %1135
        %1137 = vadd.xlane.f32.xlu0 %v1074
        %v1138 = vpop.xlane.xlu0 %1137
        %1139 = vadd.xlane.f32.xlu0 %v1076
        %v1140 = vpop.xlane.xlu0 %1139
        %v1141 = vadd.f32 %v1093, %v1110
        %v1142 = vadd.f32 %v1094, %v1112
        %v1143 = vadd.f32 %v1095, %v1114
        %v1144 = vadd.f32 %v1096, %v1116
        %v1145 = vadd.f32 %v1097, %v1118
        %v1146 = vadd.f32 %v1098, %v1120
        %v1147 = vadd.f32 %v1099, %v1122
        %v1148 = vadd.f32 %v1100, %v1124
        %v1149 = vadd.f32 %v1101, %v1126
        %v1150 = vadd.f32 %v1102, %v1128
        %v1151 = vadd.f32 %v1103, %v1130
        %v1152 = vadd.f32 %v1104, %v1132
        %v1153 = vadd.f32 %v1105, %v1134
        %v1154 = vadd.f32 %v1106, %v1136
        %v1155 = vadd.f32 %v1107, %v1138
        %v1156 = vadd.f32 %v1108, %v1140
        %vm1157 = vcmask 7168
        %1158 = vst.msk [vmem:[#allocation4] sm:$0xff] %vm1157, %v1141
        %1159 = vst.msk [vmem:[#allocation4 + $0x8] sm:$0xff] %vm1157, %v1142
        %1160 = vst.msk [vmem:[#allocation4 + $0x10] sm:$0xff] %vm1157, %v1143
        %1161 = vst.msk [vmem:[#allocation4 + $0x18] sm:$0xff] %vm1157, %v1144
        %1162 = vst.msk [vmem:[#allocation4 + $0x20] sm:$0xff] %vm1157, %v1145
        %1163 = vst.msk [vmem:[#allocation4 + $0x28] sm:$0xff] %vm1157, %v1146
        %1164 = vst.msk [vmem:[#allocation4 + $0x30] sm:$0xff] %vm1157, %v1147
        %1165 = vst.msk [vmem:[#allocation4 + $0x38] sm:$0xff] %vm1157, %v1148
        %1166 = vst.msk [vmem:[#allocation4 + $0x40] sm:$0xff] %vm1157, %v1149
        %1167 = vst.msk [vmem:[#allocation4 + $0x48] sm:$0xff] %vm1157, %v1150
        %1168 = vst.msk [vmem:[#allocation4 + $0x50] sm:$0xff] %vm1157, %v1151
        %1169 = vst.msk [vmem:[#allocation4 + $0x58] sm:$0xff] %vm1157, %v1152
        %1170 = vst.msk [vmem:[#allocation4 + $0x60] sm:$0xff] %vm1157, %v1153
        %1171 = vst.msk [vmem:[#allocation4 + $0x68] sm:$0xff] %vm1157, %v1154
        %1172 = vst.msk [vmem:[#allocation4 + $0x70] sm:$0xff] %vm1157, %v1155
        %1173 = vst.msk [vmem:[#allocation4 + $0x78] sm:$0xff] %vm1157, %v1156
        %v1174 = vld [vmem:[#allocation5] sm:$0xff]
        %v1175 = vld [vmem:[#allocation5 + $0x8] sm:$0xff]
        %v1176 = vld [vmem:[#allocation5 + $0x10] sm:$0xff]
        %v1177 = vld [vmem:[#allocation5 + $0x18] sm:$0xff]
        %v1178 = vld [vmem:[#allocation5 + $0x20] sm:$0xff]
        %v1179 = vld [vmem:[#allocation5 + $0x28] sm:$0xff]
        %v1180 = vld [vmem:[#allocation5 + $0x30] sm:$0xff]
        %v1181 = vld [vmem:[#allocation5 + $0x38] sm:$0xff]
        %v1182 = vld [vmem:[#allocation5 + $0x40] sm:$0xff]
        %v1183 = vld [vmem:[#allocation5 + $0x48] sm:$0xff]
        %v1184 = vld [vmem:[#allocation5 + $0x50] sm:$0xff]
        %v1185 = vld [vmem:[#allocation5 + $0x58] sm:$0xff]
        %v1186 = vld [vmem:[#allocation5 + $0x60] sm:$0xff]
        %v1187 = vld [vmem:[#allocation5 + $0x68] sm:$0xff]
        %v1188 = vld [vmem:[#allocation5 + $0x70] sm:$0xff]
        %v1189 = vld [vmem:[#allocation5 + $0x78] sm:$0xff]
        %1191 = vset.pattern.permute.xlu0 0
        %1192 = vperm.xlu0 %1191, %v918
        %v1193 = vpop.permute.xlu0 %1192
        %1196 = vset.pattern.permute.xlu0 0
        %1197 = vperm.xlu0 %1196, %v920
        %v1198 = vpop.permute.xlu0 %1197
        %1201 = vset.pattern.permute.xlu0 0
        %1202 = vperm.xlu0 %1201, %v922
        %v1203 = vpop.permute.xlu0 %1202
        %1206 = vset.pattern.permute.xlu0 0
        %1207 = vperm.xlu0 %1206, %v924
        %v1208 = vpop.permute.xlu0 %1207
        %1211 = vset.pattern.permute.xlu0 0
        %1212 = vperm.xlu0 %1211, %v926
        %v1213 = vpop.permute.xlu0 %1212
        %1216 = vset.pattern.permute.xlu0 0
        %1217 = vperm.xlu0 %1216, %v928
        %v1218 = vpop.permute.xlu0 %1217
        %1221 = vset.pattern.permute.xlu0 0
        %1222 = vperm.xlu0 %1221, %v930
        %v1223 = vpop.permute.xlu0 %1222
        %1226 = vset.pattern.permute.xlu0 0
        %1227 = vperm.xlu0 %1226, %v932
        %v1228 = vpop.permute.xlu0 %1227
        %1231 = vset.pattern.permute.xlu0 0
        %1232 = vperm.xlu0 %1231, %v934
        %v1233 = vpop.permute.xlu0 %1232
        %1236 = vset.pattern.permute.xlu0 0
        %1237 = vperm.xlu0 %1236, %v936
        %v1238 = vpop.permute.xlu0 %1237
        %1241 = vset.pattern.permute.xlu0 0
        %1242 = vperm.xlu0 %1241, %v938
        %v1243 = vpop.permute.xlu0 %1242
        %1246 = vset.pattern.permute.xlu0 0
        %1247 = vperm.xlu0 %1246, %v940
        %v1248 = vpop.permute.xlu0 %1247
        %1251 = vset.pattern.permute.xlu0 0
        %1252 = vperm.xlu0 %1251, %v942
        %v1253 = vpop.permute.xlu0 %1252
        %1256 = vset.pattern.permute.xlu0 0
        %1257 = vperm.xlu0 %1256, %v944
        %v1258 = vpop.permute.xlu0 %1257
        %1261 = vset.pattern.permute.xlu0 0
        %1262 = vperm.xlu0 %1261, %v946
        %v1263 = vpop.permute.xlu0 %1262
        %1266 = vset.pattern.permute.xlu0 0
        %1267 = vperm.xlu0 %1266, %v948
        %v1268 = vpop.permute.xlu0 %1267
        %v1270 = vmul.f32 %v1193, %v1174
        %v1271 = vmul.f32 %v1198, %v1175
        %v1272 = vmul.f32 %v1203, %v1176
        %v1273 = vmul.f32 %v1208, %v1177
        %v1274 = vmul.f32 %v1213, %v1178
        %v1275 = vmul.f32 %v1218, %v1179
        %v1276 = vmul.f32 %v1223, %v1180
        %v1277 = vmul.f32 %v1228, %v1181
        %v1278 = vmul.f32 %v1233, %v1182
        %v1279 = vmul.f32 %v1238, %v1183
        %v1280 = vmul.f32 %v1243, %v1184
        %v1281 = vmul.f32 %v1248, %v1185
        %v1282 = vmul.f32 %v1253, %v1186
        %v1283 = vmul.f32 %v1258, %v1187
        %v1284 = vmul.f32 %v1263, %v1188
        %v1285 = vmul.f32 %v1268, %v1189
        %v1286 = vpack.c.bf16 %v1048, %v1046
        %v1287 = vpack.c.bf16 %v1052, %v1050
        %v1288 = vpack.c.bf16 %v1056, %v1054
        %v1289 = vpack.c.bf16 %v1060, %v1058
        %v1290 = vpack.c.bf16 %v1064, %v1062
        %v1291 = vpack.c.bf16 %v1068, %v1066
        %v1292 = vpack.c.bf16 %v1072, %v1070
        %v1293 = vpack.c.bf16 %v1076, %v1074
        %1294 = vmatpush.bf16.xpose.msra.mxu0 0
        %1295 = vmatpush.bf16.xpose.msra.mxu0 0
        %1296 = vmatpush.bf16.xpose.msra.mxu0 0
        %1297 = vmatpush.bf16.xpose.msra.mxu0 0
        %1298 = vmatpush.bf16.xpose.msra.mxu0 %v758
        %1299 = vmatpush.bf16.xpose.msra.mxu0 %v757
        %1300 = vmatpush.bf16.xpose.msra.mxu0 %v756
        %1301 = vmatpush.bf16.xpose.msra.mxu0 %v755
        %1302 = vmatmul.bf16.gmra.mxu0 %v1286
        %v1303 = vpop.f32.mrf.mxu0
        %v1304 = vadd.f32 0.0, %v1303
        %v1305 = vpop.f32.mrf.mxu0
        %v1306 = vadd.f32 0.0, %v1305
        %1307 = vmatmul.bf16.gmra.mxu0 %v1287
        %v1308 = vpop.f32.mrf.mxu0
        %v1309 = vadd.f32 0.0, %v1308
        %v1310 = vpop.f32.mrf.mxu0
        %v1311 = vadd.f32 0.0, %v1310
        %1312 = vmatmul.bf16.gmra.mxu0 %v1288
        %v1313 = vpop.f32.mrf.mxu0
        %v1314 = vadd.f32 0.0, %v1313
        %v1315 = vpop.f32.mrf.mxu0
        %v1316 = vadd.f32 0.0, %v1315
        %1317 = vmatmul.bf16.gmra.mxu0 %v1289
        %v1318 = vpop.f32.mrf.mxu0
        %v1319 = vadd.f32 0.0, %v1318
        %v1320 = vpop.f32.mrf.mxu0
        %v1321 = vadd.f32 0.0, %v1320
        %1322 = vmatmul.bf16.gmra.mxu0 %v1290
        %v1323 = vpop.f32.mrf.mxu0
        %v1324 = vadd.f32 0.0, %v1323
        %v1325 = vpop.f32.mrf.mxu0
        %v1326 = vadd.f32 0.0, %v1325
        %1327 = vmatmul.bf16.gmra.mxu0 %v1291
        %v1328 = vpop.f32.mrf.mxu0
        %v1329 = vadd.f32 0.0, %v1328
        %v1330 = vpop.f32.mrf.mxu0
        %v1331 = vadd.f32 0.0, %v1330
        %1332 = vmatmul.bf16.gmra.mxu0 %v1292
        %v1333 = vpop.f32.mrf.mxu0
        %v1334 = vadd.f32 0.0, %v1333
        %v1335 = vpop.f32.mrf.mxu0
        %v1336 = vadd.f32 0.0, %v1335
        %1337 = vmatmul.bf16.gmra.mxu0 %v1293
        %v1338 = vpop.f32.mrf.mxu0
        %v1339 = vadd.f32 0.0, %v1338
        %v1340 = vpop.f32.mrf.mxu0
        %v1341 = vadd.f32 0.0, %v1340
        %1342 = vdwg.mxu0
        %v1343 = vadd.f32 %v1270, %v1304
        %v1344 = vadd.f32 %v1271, %v1306
        %v1345 = vadd.f32 %v1272, %v1309
        %v1346 = vadd.f32 %v1273, %v1311
        %v1347 = vadd.f32 %v1274, %v1314
        %v1348 = vadd.f32 %v1275, %v1316
        %v1349 = vadd.f32 %v1276, %v1319
        %v1350 = vadd.f32 %v1277, %v1321
        %v1351 = vadd.f32 %v1278, %v1324
        %v1352 = vadd.f32 %v1279, %v1326
        %v1353 = vadd.f32 %v1280, %v1329
        %v1354 = vadd.f32 %v1281, %v1331
        %v1355 = vadd.f32 %v1282, %v1334
        %v1356 = vadd.f32 %v1283, %v1336
        %v1357 = vadd.f32 %v1284, %v1339
        %v1358 = vadd.f32 %v1285, %v1341
        %1359 = vst.msk [vmem:[#allocation5] sm:$0xff] %vm763, %v1343
        %1360 = vst.msk [vmem:[#allocation5 + $0x8] sm:$0xff] %vm763, %v1344
        %1361 = vst.msk [vmem:[#allocation5 + $0x10] sm:$0xff] %vm763, %v1345
        %1362 = vst.msk [vmem:[#allocation5 + $0x18] sm:$0xff] %vm763, %v1346
        %1363 = vst.msk [vmem:[#allocation5 + $0x20] sm:$0xff] %vm763, %v1347
        %1364 = vst.msk [vmem:[#allocation5 + $0x28] sm:$0xff] %vm763, %v1348
        %1365 = vst.msk [vmem:[#allocation5 + $0x30] sm:$0xff] %vm763, %v1349
        %1366 = vst.msk [vmem:[#allocation5 + $0x38] sm:$0xff] %vm763, %v1350
        %1367 = vst.msk [vmem:[#allocation5 + $0x40] sm:$0xff] %vm763, %v1351
        %1368 = vst.msk [vmem:[#allocation5 + $0x48] sm:$0xff] %vm763, %v1352
        %1369 = vst.msk [vmem:[#allocation5 + $0x50] sm:$0xff] %vm763, %v1353
        %1370 = vst.msk [vmem:[#allocation5 + $0x58] sm:$0xff] %vm763, %v1354
        %1371 = vst.msk [vmem:[#allocation5 + $0x60] sm:$0xff] %vm763, %v1355
        %1372 = vst.msk [vmem:[#allocation5 + $0x68] sm:$0xff] %vm763, %v1356
        %1373 = vst.msk [vmem:[#allocation5 + $0x70] sm:$0xff] %vm763, %v1357
        %1374 = vst.msk [vmem:[#allocation5 + $0x78] sm:$0xff] %vm763, %v1358
        %1375 = vst.msk [vmem:[#allocation3] sm:$0xff] %vm1157, %v885
        %1376 = vst.msk [vmem:[#allocation3 + $0x8] sm:$0xff] %vm1157, %v886
        %1377 = vst.msk [vmem:[#allocation3 + $0x10] sm:$0xff] %vm1157, %v887
        %1378 = vst.msk [vmem:[#allocation3 + $0x18] sm:$0xff] %vm1157, %v888
        %1379 = vst.msk [vmem:[#allocation3 + $0x20] sm:$0xff] %vm1157, %v889
        %1380 = vst.msk [vmem:[#allocation3 + $0x28] sm:$0xff] %vm1157, %v890
        %1381 = vst.msk [vmem:[#allocation3 + $0x30] sm:$0xff] %vm1157, %v891
        %1382 = vst.msk [vmem:[#allocation3 + $0x38] sm:$0xff] %vm1157, %v892
        %1383 = vst.msk [vmem:[#allocation3 + $0x40] sm:$0xff] %vm1157, %v893
        %1384 = vst.msk [vmem:[#allocation3 + $0x48] sm:$0xff] %vm1157, %v894
        %1385 = vst.msk [vmem:[#allocation3 + $0x50] sm:$0xff] %vm1157, %v895
        %1386 = vst.msk [vmem:[#allocation3 + $0x58] sm:$0xff] %vm1157, %v896
        %1387 = vst.msk [vmem:[#allocation3 + $0x60] sm:$0xff] %vm1157, %v897
        %1388 = vst.msk [vmem:[#allocation3 + $0x68] sm:$0xff] %vm1157, %v898
        %1389 = vst.msk [vmem:[#allocation3 + $0x70] sm:$0xff] %vm1157, %v899
        %1390 = vst.msk [vmem:[#allocation3 + $0x78] sm:$0xff] %vm1157, %v900
        %p1391 = scmp.eq.s32.totalorder %s36, 1
        // Predicated region
        $region69: #{tpu_custom_call.1} parent=47 // pred_check
          %p1392 = pneg %p1391
        $region70: #{tpu_custom_call.1} parent=47 // pred_check_branch
          %1394 = sbr.rel (%p1392) target = $region72
        $region71: #{tpu_custom_call.1} parent=47 // pred_region
          %v1395 = vld [vmem:[#allocation4] sm:$0xff]
          %v1396 = vld [vmem:[#allocation4 + $0x8] sm:$0xff]
          %v1397 = vld [vmem:[#allocation4 + $0x10] sm:$0xff]
          %v1398 = vld [vmem:[#allocation4 + $0x18] sm:$0xff]
          %v1399 = vld [vmem:[#allocation4 + $0x20] sm:$0xff]
          %v1400 = vld [vmem:[#allocation4 + $0x28] sm:$0xff]
          %v1401 = vld [vmem:[#allocation4 + $0x30] sm:$0xff]
          %v1402 = vld [vmem:[#allocation4 + $0x38] sm:$0xff]
          %v1403 = vld [vmem:[#allocation4 + $0x40] sm:$0xff]
          %v1404 = vld [vmem:[#allocation4 + $0x48] sm:$0xff]
          %v1405 = vld [vmem:[#allocation4 + $0x50] sm:$0xff]
          %v1406 = vld [vmem:[#allocation4 + $0x58] sm:$0xff]
          %v1407 = vld [vmem:[#allocation4 + $0x60] sm:$0xff]
          %v1408 = vld [vmem:[#allocation4 + $0x68] sm:$0xff]
          %v1409 = vld [vmem:[#allocation4 + $0x70] sm:$0xff]
          %v1410 = vld [vmem:[#allocation4 + $0x78] sm:$0xff]
          %v1411 = vrcp.pop %v1395
          %v1412 = vrcp.pop %v1396
          %v1413 = vrcp.pop %v1397
          %v1414 = vrcp.pop %v1398
          %v1415 = vrcp.pop %v1399
          %v1416 = vrcp.pop %v1400
          %v1417 = vrcp.pop %v1401
          %v1418 = vrcp.pop %v1402
          %v1419 = vrcp.pop %v1403
          %v1420 = vrcp.pop %v1404
          %v1421 = vrcp.pop %v1405
          %v1422 = vrcp.pop %v1406
          %v1423 = vrcp.pop %v1407
          %v1424 = vrcp.pop %v1408
          %v1425 = vrcp.pop %v1409
          %v1426 = vrcp.pop %v1410
          %v1427 = vld [vmem:[#allocation5] sm:$0xff]
          %v1428 = vld [vmem:[#allocation5 + $0x8] sm:$0xff]
          %v1429 = vld [vmem:[#allocation5 + $0x10] sm:$0xff]
          %v1430 = vld [vmem:[#allocation5 + $0x18] sm:$0xff]
          %v1431 = vld [vmem:[#allocation5 + $0x20] sm:$0xff]
          %v1432 = vld [vmem:[#allocation5 + $0x28] sm:$0xff]
          %v1433 = vld [vmem:[#allocation5 + $0x30] sm:$0xff]
          %v1434 = vld [vmem:[#allocation5 + $0x38] sm:$0xff]
          %v1435 = vld [vmem:[#allocation5 + $0x40] sm:$0xff]
          %v1436 = vld [vmem:[#allocation5 + $0x48] sm:$0xff]
          %v1437 = vld [vmem:[#allocation5 + $0x50] sm:$0xff]
          %v1438 = vld [vmem:[#allocation5 + $0x58] sm:$0xff]
          %v1439 = vld [vmem:[#allocation5 + $0x60] sm:$0xff]
          %v1440 = vld [vmem:[#allocation5 + $0x68] sm:$0xff]
          %v1441 = vld [vmem:[#allocation5 + $0x70] sm:$0xff]
          %v1442 = vld [vmem:[#allocation5 + $0x78] sm:$0xff]
          %1444 = vset.pattern.permute.xlu0 0
          %1445 = vperm.xlu0 %1444, %v1411
          %v1446 = vpop.permute.xlu0 %1445
          %1449 = vset.pattern.permute.xlu0 0
          %1450 = vperm.xlu0 %1449, %v1412
          %v1451 = vpop.permute.xlu0 %1450
          %1454 = vset.pattern.permute.xlu0 0
          %1455 = vperm.xlu0 %1454, %v1413
          %v1456 = vpop.permute.xlu0 %1455
          %1459 = vset.pattern.permute.xlu0 0
          %1460 = vperm.xlu0 %1459, %v1414
          %v1461 = vpop.permute.xlu0 %1460
          %1464 = vset.pattern.permute.xlu0 0
          %1465 = vperm.xlu0 %1464, %v1415
          %v1466 = vpop.permute.xlu0 %1465
          %1469 = vset.pattern.permute.xlu0 0
          %1470 = vperm.xlu0 %1469, %v1416
          %v1471 = vpop.permute.xlu0 %1470
          %1474 = vset.pattern.permute.xlu0 0
          %1475 = vperm.xlu0 %1474, %v1417
          %v1476 = vpop.permute.xlu0 %1475
          %1479 = vset.pattern.permute.xlu0 0
          %1480 = vperm.xlu0 %1479, %v1418
          %v1481 = vpop.permute.xlu0 %1480
          %1484 = vset.pattern.permute.xlu0 0
          %1485 = vperm.xlu0 %1484, %v1419
          %v1486 = vpop.permute.xlu0 %1485
          %1489 = vset.pattern.permute.xlu0 0
          %1490 = vperm.xlu0 %1489, %v1420
          %v1491 = vpop.permute.xlu0 %1490
          %1494 = vset.pattern.permute.xlu0 0
          %1495 = vperm.xlu0 %1494, %v1421
          %v1496 = vpop.permute.xlu0 %1495
          %1499 = vset.pattern.permute.xlu0 0
          %1500 = vperm.xlu0 %1499, %v1422
          %v1501 = vpop.permute.xlu0 %1500
          %1504 = vset.pattern.permute.xlu0 0
          %1505 = vperm.xlu0 %1504, %v1423
          %v1506 = vpop.permute.xlu0 %1505
          %1509 = vset.pattern.permute.xlu0 0
          %1510 = vperm.xlu0 %1509, %v1424
          %v1511 = vpop.permute.xlu0 %1510
          %1514 = vset.pattern.permute.xlu0 0
          %1515 = vperm.xlu0 %1514, %v1425
          %v1516 = vpop.permute.xlu0 %1515
          %1519 = vset.pattern.permute.xlu0 0
          %1520 = vperm.xlu0 %1519, %v1426
          %v1521 = vpop.permute.xlu0 %1520
          %v1523 = vmul.f32 %v1427, %v1446
          %v1524 = vmul.f32 %v1428, %v1451
          %v1525 = vmul.f32 %v1429, %v1456
          %v1526 = vmul.f32 %v1430, %v1461
          %v1527 = vmul.f32 %v1431, %v1466
          %v1528 = vmul.f32 %v1432, %v1471
          %v1529 = vmul.f32 %v1433, %v1476
          %v1530 = vmul.f32 %v1434, %v1481
          %v1531 = vmul.f32 %v1435, %v1486
          %v1532 = vmul.f32 %v1436, %v1491
          %v1533 = vmul.f32 %v1437, %v1496
          %v1534 = vmul.f32 %v1438, %v1501
          %v1535 = vmul.f32 %v1439, %v1506
          %v1536 = vmul.f32 %v1440, %v1511
          %v1537 = vmul.f32 %v1441, %v1516
          %v1538 = vmul.f32 %v1442, %v1521
          %v1539 = vpack.c.bf16 %v1524, %v1523
          %v1540 = vpack.c.bf16 %v1526, %v1525
          %v1541 = vpack.c.bf16 %v1528, %v1527
          %v1542 = vpack.c.bf16 %v1530, %v1529
          %v1543 = vpack.c.bf16 %v1532, %v1531
          %v1544 = vpack.c.bf16 %v1534, %v1533
          %v1545 = vpack.c.bf16 %v1536, %v1535
          %v1546 = vpack.c.bf16 %v1538, %v1537
          %v1547 = vld [vmem:[#allocation13] sm:$0xf]
          %v1548 = vld [vmem:[#allocation13 + $0x4] sm:$0xf]
          %v1549 = vld [vmem:[#allocation13 + $0x8] sm:$0xf]
          %v1550 = vld [vmem:[#allocation13 + $0xc] sm:$0xf]
          %v1551 = vld [vmem:[#allocation13 + $0x10] sm:$0xf]
          %v1552 = vld [vmem:[#allocation13 + $0x14] sm:$0xf]
          %v1553 = vld [vmem:[#allocation13 + $0x18] sm:$0xf]
          %v1554 = vld [vmem:[#allocation13 + $0x1c] sm:$0xf]
          %s1555 = sld [smem:[#allocation6]]
          %v1556 = vld [vmem:[%s5] sm:$0xff]
          %v1557 = vld [vmem:[%s5 + $0x8] sm:$0xff]
          %v1558 = vld [vmem:[%s5 + $0x10] sm:$0xff]
          %v1559 = vld [vmem:[%s5 + $0x18] sm:$0xff]
          %v1560 = vld [vmem:[%s5 + $0x20] sm:$0xff]
          %v1561 = vld [vmem:[%s5 + $0x28] sm:$0xff]
          %v1562 = vld [vmem:[%s5 + $0x30] sm:$0xff]
          %v1563 = vld [vmem:[%s5 + $0x38] sm:$0xff]
          %1565 = vset.pattern.permute.xlu0 0
          %1566 = vperm.xlu0 %1565, %v1556
          %v1567 = vpop.permute.xlu0 %1566
          %1570 = vset.pattern.permute.xlu0 0
          %1571 = vperm.xlu0 %1570, %v1557
          %v1572 = vpop.permute.xlu0 %1571
          %1575 = vset.pattern.permute.xlu0 0
          %1576 = vperm.xlu0 %1575, %v1558
          %v1577 = vpop.permute.xlu0 %1576
          %1580 = vset.pattern.permute.xlu0 0
          %1581 = vperm.xlu0 %1580, %v1559
          %v1582 = vpop.permute.xlu0 %1581
          %1585 = vset.pattern.permute.xlu0 0
          %1586 = vperm.xlu0 %1585, %v1560
          %v1587 = vpop.permute.xlu0 %1586
          %1590 = vset.pattern.permute.xlu0 0
          %1591 = vperm.xlu0 %1590, %v1561
          %v1592 = vpop.permute.xlu0 %1591
          %1595 = vset.pattern.permute.xlu0 0
          %1596 = vperm.xlu0 %1595, %v1562
          %v1597 = vpop.permute.xlu0 %1596
          %1600 = vset.pattern.permute.xlu0 0
          %1601 = vperm.xlu0 %1600, %v1563
          %v1602 = vpop.permute.xlu0 %1601
          %v1612 = vunpack.c.l.b16 %v1547
          %v1613 = vunpack.c.l.b16 %v1548
          %v1614 = vunpack.c.l.b16 %v1549
          %v1615 = vunpack.c.l.b16 %v1550
          %v1616 = vunpack.c.l.b16 %v1551
          %v1617 = vunpack.c.l.b16 %v1552
          %v1618 = vunpack.c.l.b16 %v1553
          %v1619 = vunpack.c.l.b16 %v1554
          %v1620 = vpack.c.b16 %v1613, %v1612
          %v1621 = vpack.c.b16 %v1615, %v1614
          %v1622 = vpack.c.b16 %v1617, %v1616
          %v1623 = vpack.c.b16 %v1619, %v1618
          %v1625 = vsel %vm763, %v1620, 0
          %v1628 = vsel %vm763, %v1621, 0
          %v1631 = vsel %vm763, %v1622, 0
          %v1634 = vsel %vm763, %v1623, 0
          %v1637 = vsel %vm763, %v1539, 0
          %v1640 = vsel %vm763, %v1540, 0
          %v1643 = vsel %vm763, %v1541, 0
          %v1646 = vsel %vm763, %v1542, 0
          %v1649 = vsel %vm763, %v1543, 0
          %v1652 = vsel %vm763, %v1544, 0
          %v1655 = vsel %vm763, %v1545, 0
          %v1658 = vsel %vm763, %v1546, 0
          %1660 = vmatpush.bf16.xpose.msra.mxu0 %v1658
          %1661 = vmatpush.bf16.xpose.msra.mxu0 %v1655
          %1662 = vmatpush.bf16.xpose.msra.mxu0 %v1652
          %1663 = vmatpush.bf16.xpose.msra.mxu0 %v1649
          %1664 = vmatpush.bf16.xpose.msra.mxu0 %v1646
          %1665 = vmatpush.bf16.xpose.msra.mxu0 %v1643
          %1666 = vmatpush.bf16.xpose.msra.mxu0 %v1640
          %1667 = vmatpush.bf16.xpose.msra.mxu0 %v1637
          %1668 = vmatmul.bf16.gmra.mxu0 %v1625
          %v1669 = vpop.f32.mrf.mxu0
          %v1670 = vadd.f32 %v1567, %v1669
          %v1671 = vpop.f32.mrf.mxu0
          %v1672 = vadd.f32 %v1572, %v1671
          %1673 = vmatmul.bf16.gmra.mxu0 %v1628
          %v1674 = vpop.f32.mrf.mxu0
          %v1675 = vadd.f32 %v1577, %v1674
          %v1676 = vpop.f32.mrf.mxu0
          %v1677 = vadd.f32 %v1582, %v1676
          %1678 = vmatmul.bf16.gmra.mxu0 %v1631
          %v1679 = vpop.f32.mrf.mxu0
          %v1680 = vadd.f32 %v1587, %v1679
          %v1681 = vpop.f32.mrf.mxu0
          %v1682 = vadd.f32 %v1592, %v1681
          %1683 = vmatmul.bf16.gmra.mxu0 %v1634
          %v1684 = vpop.f32.mrf.mxu0
          %v1685 = vadd.f32 %v1597, %v1684
          %v1686 = vpop.f32.mrf.mxu0
          %v1687 = vadd.f32 %v1602, %v1686
          %1688 = vdwg.mxu0
          %v1689 = vstv %s1555
          %v1690 = vmul.f32 %v1689, %v1670
          %v1691 = vmul.f32 %v1689, %v1672
          %v1692 = vmul.f32 %v1689, %v1675
          %v1693 = vmul.f32 %v1689, %v1677
          %v1694 = vmul.f32 %v1689, %v1680
          %v1695 = vmul.f32 %v1689, %v1682
          %v1696 = vmul.f32 %v1689, %v1685
          %v1697 = vmul.f32 %v1689, %v1687
          %v1698 = vld [vmem:[%s357] sm:$0xff]
          %v1699 = vld [vmem:[%s357 + $0x8] sm:$0xff]
          %v1700 = vld [vmem:[%s357 + $0x10] sm:$0xff]
          %v1701 = vld [vmem:[%s357 + $0x18] sm:$0xff]
          %v1702 = vld [vmem:[%s357 + $0x20] sm:$0xff]
          %v1703 = vld [vmem:[%s357 + $0x28] sm:$0xff]
          %v1704 = vld [vmem:[%s357 + $0x30] sm:$0xff]
          %v1705 = vld [vmem:[%s357 + $0x38] sm:$0xff]
          %v1706 = vadd.f32 %v1690, %v1698
          %v1707 = vadd.f32 %v1691, %v1699
          %v1708 = vadd.f32 %v1692, %v1700
          %v1709 = vadd.f32 %v1693, %v1701
          %v1710 = vadd.f32 %v1694, %v1702
          %v1711 = vadd.f32 %v1695, %v1703
          %v1712 = vadd.f32 %v1696, %v1704
          %v1713 = vadd.f32 %v1697, %v1705
          %1714 = vst [vmem:[%s421] sm:$0xff] %v1706
          %1715 = vst [vmem:[%s421 + $0x8] sm:$0xff] %v1707
          %1716 = vst [vmem:[%s421 + $0x10] sm:$0xff] %v1708
          %1717 = vst [vmem:[%s421 + $0x18] sm:$0xff] %v1709
          %1718 = vst [vmem:[%s421 + $0x20] sm:$0xff] %v1710
          %1719 = vst [vmem:[%s421 + $0x28] sm:$0xff] %v1711
          %1720 = vst [vmem:[%s421 + $0x30] sm:$0xff] %v1712
          %1721 = vst [vmem:[%s421 + $0x38] sm:$0xff] %v1713
        $region72: #{tpu_custom_call.1} parent=47 // pred_fallthru
          _
        %s1722 = sand.u32 %s226, 1
        %s1723 = scalar_lea.sflag [#allocation9], %s1722
        %s1724 = sand.u32 %s226, 1
        %s1725 = smul.addr %s1724, 64
        %s1726 = scalar_lea.vmem [#allocation15], %s1725
        // Predicated region
        $region73: #{tpu_custom_call.1} parent=47 // pred_check
          %p1727 = pneg %p236
        $region74: #{tpu_custom_call.1} parent=47 // pred_check_branch
          %1729 = sbr.rel (%p1727) target = $region76
        $region75: #{tpu_custom_call.1} parent=47 // pred_region
          %1731 = vsyncadd %s1723, 0
          %s1732 = smul.addr %s34, 16
          %s1733 = sadd.s32 %s35, %s1732
          %s1734 = smul.addr %s1733, 8
          %s1735 = scalar_lea.hbm %s7, %s1734
          %s1736 = sshll.u32 %s1726, 4
          %s1737 = int_to_ptr.vmem [resolvable:$true] %s1736
          %s1738 = sshll.u32 %s1735, 4
          %s1739 = int_to_ptr.hbm [resolvable:$true] %s1738
          %1744 = dma.vmem_to_hbm [thread:$0]  %s1737, 1024, %s1739, %s1723, 128, 256, 8
        $region76: #{tpu_custom_call.1} parent=47 // pred_fallthru
          _
      $region48: #{tpu_custom_call.1} parent=5 // pred_fallthru
        _
      %p1745 = scmp.le.s32.totalorder 2, %s24
      // Predicated region
      $region77: #{tpu_custom_call.1} parent=5 // pred_check
        %p1746 = pneg %p1745
      $region78: #{tpu_custom_call.1} parent=5 // pred_check_branch
        %1748 = sbr.rel (%p1746) target = $region80
      $region79: #{tpu_custom_call.1} parent=5 // pred_region
        %s1749 = ssub.s32 %s24, 2
        // Predicated region
        $region81: #{tpu_custom_call.1} parent=79 // pred_check
          %p1750 = pneg %p242
        $region82: #{tpu_custom_call.1} parent=79 // pred_check_branch
          %1752 = sbr.rel (%p1750) target = $region84
        $region83: #{tpu_custom_call.1} parent=79 // pred_region
          %s1753 = sand.u32 %s227, 1
          %s1754 = scalar_lea.sflag [#allocation9], %s1753
          %s1755 = sand.u32 %s227, 1
          %s1756 = smul.addr %s1755, 64
          %s1757 = scalar_lea.vmem [#allocation15], %s1756
          %1759 = dma.done %s1754, 1024
        $region84: #{tpu_custom_call.1} parent=79 // pred_fallthru
          _
      $region80: #{tpu_custom_call.1} parent=5 // pred_fallthru
        _
    $region6: #{tpu_custom_call.1} parent=1 // loop_footer
      %s28 = sadd.s32 1, %s24
    $region7: #{tpu_custom_call.1} parent=1 // loop_footer_branch
      %23 = sbr.rel target = $region3
    $region8: #{tpu_custom_call.1} parent=1 // loop_exit
      _
    %1760 = vsyncpa [#allocation8], 1
    %s1761 = scalar_lea.sflag [#allocation8], 1
    %1762 = vsyncpa %s1761, 1
    %1763 = vsyncpa [#allocation11], 1
    %s1764 = scalar_lea.sflag [#allocation11], 1
    %1765 = vsyncpa %s1764, 1
    %1766 = vsyncpa [#allocation14], 1
    %1767 = vsyncpa [#allocation9], 1
    %s1768 = scalar_lea.sflag [#allocation9], 1
    %1769 = vsyncpa %s1768, 1

</llo_original>
